<compile_context>
chip_gen: v5e
topology: v5e:2x2
jax: 0.10.0
libtpu: 0.0.40
codegen_flags: <defaults>
</compile_context>

<pallas_src>
import functools

import jax
import jax.numpy as jnp
from jax.experimental import pallas as pl
from jax.experimental.pallas import tpu as pltpu

LN_EPS = 1e-5

_PARAM_KEYS = ("w1", "b1", "ws", "bs", "gamma", "beta", "w3", "b3", "cmin", "cmax")


def _round_up(n, m):
    return ((n + m - 1) // m) * m


# -------------------------- in-kernel math helpers --------------------------

def _mish(x):
    # mish(x) = x * tanh(softplus(x)) = x * (1 - 2 / ((1 + e^x)^2 + 1)).
    # 1 EUP transcendental (exp) + 1 reciprocal; for large x, exp overflows to
    # inf and the correction term becomes 0 -> mish(x) = x, matching the torch
    # softplus threshold branch.  approx=False keeps full f32 accuracy.
    t = 1.0 + jnp.exp(x)
    return x * (1.0 - 2.0 * pl.reciprocal(t * t + 1.0))


def _layernorm(x, gamma, beta):
    # Centered two-pass variance (biased, like torch.nn.LayerNorm).  Avoids
    # the E[x^2] - mean^2 cancellation in f32.
    mean = jnp.mean(x, axis=-1, keepdims=True)
    xc = x - mean
    var = jnp.mean(xc * xc, axis=-1, keepdims=True)
    return xc * jax.lax.rsqrt(var + LN_EPS) * gamma + beta


# --------------------------------- kernel -----------------------------------

def _gen_kernel(z_ref, w1_ref, b1_ref, ws_ref, bs_ref, gamma_ref, beta_ref,
                w3_ref, b3_ref, cmin_ref, cmax_ref, out_ref, *, g_layers):
    # map1 + Mish.  Activations cast to the (bf16) weight dtype at the matmul;
    # accumulation and all elementwise math stay f32.
    w1 = w1_ref[...]
    h = jnp.dot(z_ref[...].astype(w1.dtype), w1,
                preferred_element_type=jnp.float32) + b1_ref[...]
    h = _mish(h)
    # hidden stack: Linear -> LayerNorm -> Mish  (g_layers small & static)
    for i in range(g_layers):
        w = ws_ref[i]
        h = jnp.dot(h.astype(w.dtype), w,
                    preferred_element_type=jnp.float32) + bs_ref[i]
        h = _mish(_layernorm(h, gamma_ref[i], beta_ref[i]))
    # map3 (output dim zero-padded to a lane-dense multiple of 128) + clamp
    w3 = w3_ref[...]
    o = jnp.dot(h.astype(w3.dtype), w3,
                preferred_element_type=jnp.float32) + b3_ref[...]
    out_ref[...] = jnp.minimum(jnp.maximum(o, cmin_ref[...]), cmax_ref[...])


# -------------------------------- wrapper ------------------------------------

def generator(z, p, *, g_layers, x_dim, block_b=256):
    """z: (B, z_dim) f32 latent. Returns (B, x_dim) f32 samples."""
    batch, z_dim = z.shape
    g_dim = p["w1"].shape[1]
    x_pad = p["w3"].shape[1]

    # Batch tiling: tb is a multiple of 8 (sublanes) and is chosen so that the
    # batch splits into >=2 grid steps whenever batch >= 16 (both v7x TCs get
    # work; harmless on 1-TC v5e/v6e).  Raise block_b on 128-MiB v5e/v6e for
    # very large batches.
    tb = min(block_b, max(8, _round_up(pl.cdiv(batch, 2), 8)))
    b_pad = _round_up(batch, tb)
    zp = jnp.pad(z, ((0, b_pad - batch), (0, 0))) if b_pad != batch else z

    params = [p[k] for k in _PARAM_KEYS]

    # Explicit scoped-VMEM limit: resident params (assume worst-case double
    # buffering) + double-buffered activation blocks + working intermediates,
    # with 2x headroom, clamped to [32 MiB, 64 MiB] (valid on every chip gen).
    param_bytes = sum(int(a.size) * a.dtype.itemsize for a in params)
    act_bytes = tb * (z_dim + x_pad) * 4 * 2
    work_bytes = tb * max(g_dim, x_pad) * 4 * 8
    vmem_limit = int(min(max(2 * (2 * param_bytes + act_bytes + work_bytes),
                             32 << 20), 64 << 20))

    kernel = functools.partial(_gen_kernel, g_layers=g_layers)

    def run(single_buffer_params):
        def const_spec(a):
            # Parameters use a constant index_map -> resident across grid
            # steps; request a single pipeline buffer to halve their VMEM.
            if single_buffer_params:
                return pl.BlockSpec(a.shape, lambda i: (0,) * a.ndim,
                                    pipeline_mode=pl.Buffered(1))
            return pl.BlockSpec(a.shape, lambda i: (0,) * a.ndim)

        return pl.pallas_call(
            kernel,
            out_shape=jax.ShapeDtypeStruct((b_pad, x_pad), jnp.float32),
            grid=(b_pad // tb,),
            in_specs=[pl.BlockSpec((tb, z_dim), lambda i: (i, 0))]
                     + [const_spec(a) for a in params],
            out_specs=pl.BlockSpec((tb, x_pad), lambda i: (i, 0)),
            compiler_params=pltpu.CompilerParams(
                dimension_semantics=("parallel",),
                vmem_limit_bytes=vmem_limit),
        )(zp, *params)

    try:
        out = jax.block_until_ready(run(True))
    except Exception:
        # Fallback for jax versions without single-buffer pipeline_mode
        # support: default double-buffered resident params (VMEM cost only).
        out = run(False)
    return out[:batch, :x_dim]


# ----------------------------- params / reference ----------------------------

def init_params(key, cmin, cmax, *, z_dim, x_dim, g_dim, g_layers):
    assert g_dim % 128 == 0, "use a lane-dense (multiple of 128) hidden dim"
    x_pad = _round_up(x_dim, 128)
    ks = jax.random.split(key, 6)
    std1 = (2.0 / z_dim) ** 0.5      # kaiming_normal_-style fan-in scaling
    stdh = (2.0 / g_dim) ** 0.5
    w3 = jax.random.normal(ks[4], (g_dim, x_dim), jnp.float32) * stdh
    b3 = jax.random.normal(ks[5], (1, x_dim), jnp.float32) * 0.05
    pad = ((0, 0), (0, x_pad - x_dim))
    return {
        # Linear weights pre-transposed (in, out) and stored bf16 (MXU-rate
        # operands, half the DMA / resident bytes).  Biases, LayerNorm affine
        # params and clamp bounds stay f32 (applied after f32 accumulation).
        "w1": (jax.random.normal(ks[0], (z_dim, g_dim), jnp.float32) * std1
               ).astype(jnp.bfloat16),
        "b1": jax.random.normal(ks[1], (1, g_dim), jnp.float32) * 0.05,
        "ws": (jax.random.normal(ks[2], (g_layers, g_dim, g_dim), jnp.float32)
               * stdh).astype(jnp.bfloat16),
        "bs": jax.random.normal(ks[3], (g_layers, 1, g_dim), jnp.float32) * 0.05,
        "gamma": jnp.ones((g_layers, 1, g_dim), jnp.float32),
        "beta": jnp.zeros((g_layers, 1, g_dim), jnp.float32),
        # Output-side params zero-padded once to a lane-dense width (unmasked
        # stores in the kernel); the wrapper slices the padding back off.
        "w3": jnp.pad(w3, pad).astype(jnp.bfloat16),
        "b3": jnp.pad(b3, pad),
        "cmin": jnp.pad(jnp.asarray(cmin, jnp.float32)[None, :], pad),
        "cmax": jnp.pad(jnp.asarray(cmax, jnp.float32)[None, :], pad),
    }


def _mish_ref(x):
    # Matches torch F.softplus (beta=1, threshold=20) + tanh.
    sp = jnp.where(x > 20.0, x, jnp.log1p(jnp.exp(jnp.minimum(x, 20.0))))
    return x * jnp.tanh(sp)


def reference(z, p, *, g_layers, x_dim):
    hp = jax.lax.Precision.HIGHEST
    f32 = lambda a: a.astype(jnp.float32)
    h = _mish_ref(jnp.dot(z, f32(p["w1"]), precision=hp) + p["b1"][0])
    for i in range(g_layers):
        h = jnp.dot(h, f32(p["ws"][i]), precision=hp) + p["bs"][i, 0]
        mean = jnp.mean(h, axis=-1, keepdims=True)
        var = jnp.mean((h - mean) ** 2, axis=-1, keepdims=True)
        h = (h - mean) * jax.lax.rsqrt(var + LN_EPS) * p["gamma"][i, 0] + p["beta"][i, 0]
        h = _mish_ref(h)
    o = jnp.dot(h, f32(p["w3"]), precision=hp) + p["b3"][0]
    o = jnp.minimum(jnp.maximum(o, p["cmin"][0]), p["cmax"][0])
    return o[:, :x_dim]


# ----------------------------------- main ------------------------------------

if __name__ == "__main__":
    # Generator config: act='Mish', g_norm=True, g_norm_type='layer'.
    # batch=32 -> two grid steps, exercising the parallel batch grid.
    batch, z_dim, g_dim, x_dim, g_layers = 32, 16, 128, 16, 2

    key = jax.random.PRNGKey(0)
    kz, kc, kp = jax.random.split(key, 3)
    z = jax.random.normal(kz, (batch, z_dim), jnp.float32)
    spread = jnp.abs(jax.random.normal(kc, (x_dim,), jnp.float32))
    cmin = -(0.5 + spread)          # per-feature lower clamp
    cmax = 0.5 + spread             # per-feature upper clamp
    params = init_params(kp, cmin, cmax, z_dim=z_dim, x_dim=x_dim,
                         g_dim=g_dim, g_layers=g_layers)

    out = generator(z, params, g_layers=g_layers, x_dim=x_dim)
    out = jax.block_until_ready(out)

    ref = reference(z, params, g_layers=g_layers, x_dim=x_dim)
    assert out.shape == (batch, x_dim)
    # bf16 matmul operands in the kernel vs. a Precision.HIGHEST f32 reference
    # -> relaxed tolerance (observed error is a few 1e-3).
    max_err = float(jnp.max(jnp.abs(out - ref)))
    assert jnp.allclose(out, ref, atol=2e-2, rtol=2e-2), ("max_err", max_err)
    print("KERNEL_OK")
</pallas_src>

<mosaic_0001>
module attributes {stable_mosaic.version = 11 : i64} {
  func.func @_gen_kernel(%arg0: i32, %arg1: memref<16x16xf32, #tpu.memory_space<vmem>>, %arg2: memref<16x128xbf16, #tpu.memory_space<vmem>>, %arg3: memref<1x128xf32, #tpu.memory_space<vmem>>, %arg4: memref<2x128x128xbf16, #tpu.memory_space<vmem>>, %arg5: memref<2x1x128xf32, #tpu.memory_space<vmem>>, %arg6: memref<2x1x128xf32, #tpu.memory_space<vmem>>, %arg7: memref<2x1x128xf32, #tpu.memory_space<vmem>>, %arg8: memref<128x128xbf16, #tpu.memory_space<vmem>>, %arg9: memref<1x128xf32, #tpu.memory_space<vmem>>, %arg10: memref<1x128xf32, #tpu.memory_space<vmem>>, %arg11: memref<1x128xf32, #tpu.memory_space<vmem>>, %arg12: memref<16x128xf32, #tpu.memory_space<vmem>>) attributes {dimension_semantics = [#tpu.dimension_semantics<parallel>], iteration_bounds = array<i64: 2>, scalar_prefetch = 0 : i64, scratch_operands = 0 : i64, tpu.core_type = #tpu.core_type<tc>, window_params = [{transform_indices = @transform_0, window_bounds = array<i64: 16, 16>}, {pipeline_mode = #tpu.pipeline_mode<synchronous>, transform_indices = @transform_1, window_bounds = array<i64: 16, 128>}, {pipeline_mode = #tpu.pipeline_mode<synchronous>, transform_indices = @transform_2, window_bounds = array<i64: 1, 128>}, {pipeline_mode = #tpu.pipeline_mode<synchronous>, transform_indices = @transform_3, window_bounds = array<i64: 2, 128, 128>}, {pipeline_mode = #tpu.pipeline_mode<synchronous>, transform_indices = @transform_4, window_bounds = array<i64: 2, 1, 128>}, {pipeline_mode = #tpu.pipeline_mode<synchronous>, transform_indices = @transform_5, window_bounds = array<i64: 2, 1, 128>}, {pipeline_mode = #tpu.pipeline_mode<synchronous>, transform_indices = @transform_6, window_bounds = array<i64: 2, 1, 128>}, {pipeline_mode = #tpu.pipeline_mode<synchronous>, transform_indices = @transform_7, window_bounds = array<i64: 128, 128>}, {pipeline_mode = #tpu.pipeline_mode<synchronous>, transform_indices = @transform_8, window_bounds = array<i64: 1, 128>}, {pipeline_mode = #tpu.pipeline_mode<synchronous>, transform_indices = @transform_9, window_bounds = array<i64: 1, 128>}, {pipeline_mode = #tpu.pipeline_mode<synchronous>, transform_indices = @transform_10, window_bounds = array<i64: 1, 128>}, {transform_indices = @transform_11, window_bounds = array<i64: 16, 128>}]} {
    %c0 = arith.constant 0 : index
    %c0_0 = arith.constant 0 : index
    %0 = vector.load %arg2[%c0, %c0_0] : memref<16x128xbf16, #tpu.memory_space<vmem>>, vector<16x128xbf16>
    %c0_1 = arith.constant 0 : index
    %c0_2 = arith.constant 0 : index
    %1 = vector.load %arg1[%c0_1, %c0_2] : memref<16x16xf32, #tpu.memory_space<vmem>>, vector<16x16xf32>
    %2 = arith.truncf %1 : vector<16x16xf32> to vector<16x16xbf16>
    %cst = arith.constant dense<0.000000e+00> : vector<16x128xf32>
    %3 = tpu.matmul %2, %0, %cst {dimension_numbers = #tpu.dot_dimension_numbers<[1], [0], [0], [1], [0, 0, 1, 1], [], []>} : vector<16x16xbf16>, vector<16x128xbf16>, vector<16x128xf32> -> vector<16x128xf32>
    %c0_3 = arith.constant 0 : index
    %c0_4 = arith.constant 0 : index
    %4 = vector.load %arg3[%c0_3, %c0_4] : memref<1x128xf32, #tpu.memory_space<vmem>>, vector<1x128xf32>
    %5 = vector.broadcast %4 : vector<1x128xf32> to vector<16x128xf32>
    %6 = arith.addf %3, %5 : vector<16x128xf32>
    %7 = math.exp %6 : vector<16x128xf32>
    %cst_5 = arith.constant 1.000000e+00 : f32
    %8 = vector.broadcast %cst_5 : f32 to vector<16x128xf32>
    %9 = arith.addf %8, %7 : vector<16x128xf32>
    %10 = arith.mulf %9, %9 : vector<16x128xf32>
    %cst_6 = arith.constant 1.000000e+00 : f32
    %11 = vector.broadcast %cst_6 : f32 to vector<16x128xf32>
    %12 = arith.addf %10, %11 : vector<16x128xf32>
    %13 = tpu.reciprocal %12 : vector<16x128xf32> -> vector<16x128xf32>
    %cst_7 = arith.constant 2.000000e+00 : f32
    %14 = vector.broadcast %cst_7 : f32 to vector<16x128xf32>
    %15 = arith.mulf %14, %13 : vector<16x128xf32>
    %cst_8 = arith.constant 1.000000e+00 : f32
    %16 = vector.broadcast %cst_8 : f32 to vector<16x128xf32>
    %17 = arith.subf %16, %15 : vector<16x128xf32>
    %18 = arith.mulf %6, %17 : vector<16x128xf32>
    %c0_9 = arith.constant 0 : index
    %c0_10 = arith.constant 0 : index
    %c0_11 = arith.constant 0 : index
    %19 = vector.load %arg4[%c0_9, %c0_10, %c0_11] : memref<2x128x128xbf16, #tpu.memory_space<vmem>>, vector<1x128x128xbf16>
    %20 = vector.shape_cast %19 : vector<1x128x128xbf16> to vector<128x128xbf16>
    %21 = arith.truncf %18 : vector<16x128xf32> to vector<16x128xbf16>
    %cst_12 = arith.constant dense<0.000000e+00> : vector<16x128xf32>
    %22 = tpu.matmul %21, %20, %cst_12 {dimension_numbers = #tpu.dot_dimension_numbers<[1], [0], [0], [1], [0, 0, 1, 1], [], []>} : vector<16x128xbf16>, vector<128x128xbf16>, vector<16x128xf32> -> vector<16x128xf32>
    %c0_13 = arith.constant 0 : index
    %c0_14 = arith.constant 0 : index
    %c0_15 = arith.constant 0 : index
    %23 = vector.load %arg5[%c0_13, %c0_14, %c0_15] : memref<2x1x128xf32, #tpu.memory_space<vmem>>, vector<1x1x128xf32>
    %24 = vector.shape_cast %23 : vector<1x1x128xf32> to vector<1x128xf32>
    %25 = vector.broadcast %24 : vector<1x128xf32> to vector<16x128xf32>
    %26 = arith.addf %22, %25 : vector<16x128xf32>
    %c0_16 = arith.constant 0 : index
    %c0_17 = arith.constant 0 : index
    %c0_18 = arith.constant 0 : index
    %27 = vector.load %arg6[%c0_16, %c0_17, %c0_18] : memref<2x1x128xf32, #tpu.memory_space<vmem>>, vector<1x1x128xf32>
    %28 = vector.shape_cast %27 : vector<1x1x128xf32> to vector<1x128xf32>
    %c0_19 = arith.constant 0 : index
    %c0_20 = arith.constant 0 : index
    %c0_21 = arith.constant 0 : index
    %29 = vector.load %arg7[%c0_19, %c0_20, %c0_21] : memref<2x1x128xf32, #tpu.memory_space<vmem>>, vector<1x1x128xf32>
    %30 = vector.shape_cast %29 : vector<1x1x128xf32> to vector<1x128xf32>
    %cst_22 = arith.constant dense<0.000000e+00> : vector<16xf32>
    %31 = vector.multi_reduction <add>, %26, %cst_22 [1] : vector<16x128xf32> to vector<16xf32>
    %32 = vector.shape_cast %31 : vector<16xf32> to vector<16x1xf32>
    %cst_23 = arith.constant 1.280000e+02 : f32
    %33 = vector.broadcast %cst_23 : f32 to vector<16x1xf32>
    %34 = arith.divf %32, %33 : vector<16x1xf32>
    %35 = vector.broadcast %34 : vector<16x1xf32> to vector<16x128xf32>
    %36 = arith.subf %26, %35 : vector<16x128xf32>
    %37 = arith.mulf %36, %36 : vector<16x128xf32>
    %cst_24 = arith.constant dense<0.000000e+00> : vector<16xf32>
    %38 = vector.multi_reduction <add>, %37, %cst_24 [1] : vector<16x128xf32> to vector<16xf32>
    %39 = vector.shape_cast %38 : vector<16xf32> to vector<16x1xf32>
    %cst_25 = arith.constant 1.280000e+02 : f32
    %40 = vector.broadcast %cst_25 : f32 to vector<16x1xf32>
    %41 = arith.divf %39, %40 : vector<16x1xf32>
    %cst_26 = arith.constant 9.99999974E-6 : f32
    %42 = vector.broadcast %cst_26 : f32 to vector<16x1xf32>
    %43 = arith.addf %41, %42 : vector<16x1xf32>
    %44 = math.rsqrt %43 : vector<16x1xf32>
    %45 = vector.broadcast %44 : vector<16x1xf32> to vector<16x128xf32>
    %46 = arith.mulf %36, %45 : vector<16x128xf32>
    %47 = vector.broadcast %28 : vector<1x128xf32> to vector<16x128xf32>
    %48 = arith.mulf %46, %47 : vector<16x128xf32>
    %49 = vector.broadcast %30 : vector<1x128xf32> to vector<16x128xf32>
    %50 = arith.addf %48, %49 : vector<16x128xf32>
    %51 = math.exp %50 : vector<16x128xf32>
    %cst_27 = arith.constant 1.000000e+00 : f32
    %52 = vector.broadcast %cst_27 : f32 to vector<16x128xf32>
    %53 = arith.addf %52, %51 : vector<16x128xf32>
    %54 = arith.mulf %53, %53 : vector<16x128xf32>
    %cst_28 = arith.constant 1.000000e+00 : f32
    %55 = vector.broadcast %cst_28 : f32 to vector<16x128xf32>
    %56 = arith.addf %54, %55 : vector<16x128xf32>
    %57 = tpu.reciprocal %56 : vector<16x128xf32> -> vector<16x128xf32>
    %cst_29 = arith.constant 2.000000e+00 : f32
    %58 = vector.broadcast %cst_29 : f32 to vector<16x128xf32>
    %59 = arith.mulf %58, %57 : vector<16x128xf32>
    %cst_30 = arith.constant 1.000000e+00 : f32
    %60 = vector.broadcast %cst_30 : f32 to vector<16x128xf32>
    %61 = arith.subf %60, %59 : vector<16x128xf32>
    %62 = arith.mulf %50, %61 : vector<16x128xf32>
    %c1 = arith.constant 1 : index
    %c0_31 = arith.constant 0 : index
    %c0_32 = arith.constant 0 : index
    %63 = vector.load %arg4[%c1, %c0_31, %c0_32] : memref<2x128x128xbf16, #tpu.memory_space<vmem>>, vector<1x128x128xbf16>
    %64 = vector.shape_cast %63 : vector<1x128x128xbf16> to vector<128x128xbf16>
    %65 = arith.truncf %62 : vector<16x128xf32> to vector<16x128xbf16>
    %cst_33 = arith.constant dense<0.000000e+00> : vector<16x128xf32>
    %66 = tpu.matmul %65, %64, %cst_33 {dimension_numbers = #tpu.dot_dimension_numbers<[1], [0], [0], [1], [0, 0, 1, 1], [], []>} : vector<16x128xbf16>, vector<128x128xbf16>, vector<16x128xf32> -> vector<16x128xf32>
    %c1_34 = arith.constant 1 : index
    %c0_35 = arith.constant 0 : index
    %c0_36 = arith.constant 0 : index
    %67 = vector.load %arg5[%c1_34, %c0_35, %c0_36] : memref<2x1x128xf32, #tpu.memory_space<vmem>>, vector<1x1x128xf32>
    %68 = vector.shape_cast %67 : vector<1x1x128xf32> to vector<1x128xf32>
    %69 = vector.broadcast %68 : vector<1x128xf32> to vector<16x128xf32>
    %70 = arith.addf %66, %69 : vector<16x128xf32>
    %c1_37 = arith.constant 1 : index
    %c0_38 = arith.constant 0 : index
    %c0_39 = arith.constant 0 : index
    %71 = vector.load %arg6[%c1_37, %c0_38, %c0_39] : memref<2x1x128xf32, #tpu.memory_space<vmem>>, vector<1x1x128xf32>
    %72 = vector.shape_cast %71 : vector<1x1x128xf32> to vector<1x128xf32>
    %c1_40 = arith.constant 1 : index
    %c0_41 = arith.constant 0 : index
    %c0_42 = arith.constant 0 : index
    %73 = vector.load %arg7[%c1_40, %c0_41, %c0_42] : memref<2x1x128xf32, #tpu.memory_space<vmem>>, vector<1x1x128xf32>
    %74 = vector.shape_cast %73 : vector<1x1x128xf32> to vector<1x128xf32>
    %cst_43 = arith.constant dense<0.000000e+00> : vector<16xf32>
    %75 = vector.multi_reduction <add>, %70, %cst_43 [1] : vector<16x128xf32> to vector<16xf32>
    %76 = vector.shape_cast %75 : vector<16xf32> to vector<16x1xf32>
    %cst_44 = arith.constant 1.280000e+02 : f32
    %77 = vector.broadcast %cst_44 : f32 to vector<16x1xf32>
    %78 = arith.divf %76, %77 : vector<16x1xf32>
    %79 = vector.broadcast %78 : vector<16x1xf32> to vector<16x128xf32>
    %80 = arith.subf %70, %79 : vector<16x128xf32>
    %81 = arith.mulf %80, %80 : vector<16x128xf32>
    %cst_45 = arith.constant dense<0.000000e+00> : vector<16xf32>
    %82 = vector.multi_reduction <add>, %81, %cst_45 [1] : vector<16x128xf32> to vector<16xf32>
    %83 = vector.shape_cast %82 : vector<16xf32> to vector<16x1xf32>
    %cst_46 = arith.constant 1.280000e+02 : f32
    %84 = vector.broadcast %cst_46 : f32 to vector<16x1xf32>
    %85 = arith.divf %83, %84 : vector<16x1xf32>
    %cst_47 = arith.constant 9.99999974E-6 : f32
    %86 = vector.broadcast %cst_47 : f32 to vector<16x1xf32>
    %87 = arith.addf %85, %86 : vector<16x1xf32>
    %88 = math.rsqrt %87 : vector<16x1xf32>
    %89 = vector.broadcast %88 : vector<16x1xf32> to vector<16x128xf32>
    %90 = arith.mulf %80, %89 : vector<16x128xf32>
    %91 = vector.broadcast %72 : vector<1x128xf32> to vector<16x128xf32>
    %92 = arith.mulf %90, %91 : vector<16x128xf32>
    %93 = vector.broadcast %74 : vector<1x128xf32> to vector<16x128xf32>
    %94 = arith.addf %92, %93 : vector<16x128xf32>
    %95 = math.exp %94 : vector<16x128xf32>
    %cst_48 = arith.constant 1.000000e+00 : f32
    %96 = vector.broadcast %cst_48 : f32 to vector<16x128xf32>
    %97 = arith.addf %96, %95 : vector<16x128xf32>
    %98 = arith.mulf %97, %97 : vector<16x128xf32>
    %cst_49 = arith.constant 1.000000e+00 : f32
    %99 = vector.broadcast %cst_49 : f32 to vector<16x128xf32>
    %100 = arith.addf %98, %99 : vector<16x128xf32>
    %101 = tpu.reciprocal %100 : vector<16x128xf32> -> vector<16x128xf32>
    %cst_50 = arith.constant 2.000000e+00 : f32
    %102 = vector.broadcast %cst_50 : f32 to vector<16x128xf32>
    %103 = arith.mulf %102, %101 : vector<16x128xf32>
    %cst_51 = arith.constant 1.000000e+00 : f32
    %104 = vector.broadcast %cst_51 : f32 to vector<16x128xf32>
    %105 = arith.subf %104, %103 : vector<16x128xf32>
    %106 = arith.mulf %94, %105 : vector<16x128xf32>
    %c0_52 = arith.constant 0 : index
    %c0_53 = arith.constant 0 : index
    %107 = vector.load %arg8[%c0_52, %c0_53] : memref<128x128xbf16, #tpu.memory_space<vmem>>, vector<128x128xbf16>
    %108 = arith.truncf %106 : vector<16x128xf32> to vector<16x128xbf16>
    %cst_54 = arith.constant dense<0.000000e+00> : vector<16x128xf32>
    %109 = tpu.matmul %108, %107, %cst_54 {dimension_numbers = #tpu.dot_dimension_numbers<[1], [0], [0], [1], [0, 0, 1, 1], [], []>} : vector<16x128xbf16>, vector<128x128xbf16>, vector<16x128xf32> -> vector<16x128xf32>
    %c0_55 = arith.constant 0 : index
    %c0_56 = arith.constant 0 : index
    %110 = vector.load %arg9[%c0_55, %c0_56] : memref<1x128xf32, #tpu.memory_space<vmem>>, vector<1x128xf32>
    %111 = vector.broadcast %110 : vector<1x128xf32> to vector<16x128xf32>
    %112 = arith.addf %109, %111 : vector<16x128xf32>
    %c0_57 = arith.constant 0 : index
    %c0_58 = arith.constant 0 : index
    %113 = vector.load %arg10[%c0_57, %c0_58] : memref<1x128xf32, #tpu.memory_space<vmem>>, vector<1x128xf32>
    %114 = vector.broadcast %113 : vector<1x128xf32> to vector<16x128xf32>
    %115 = arith.maximumf %112, %114 : vector<16x128xf32>
    %c0_59 = arith.constant 0 : index
    %c0_60 = arith.constant 0 : index
    %116 = vector.load %arg11[%c0_59, %c0_60] : memref<1x128xf32, #tpu.memory_space<vmem>>, vector<1x128xf32>
    %117 = vector.broadcast %116 : vector<1x128xf32> to vector<16x128xf32>
    %118 = arith.minimumf %115, %117 : vector<16x128xf32>
    %c0_61 = arith.constant 0 : index
    %c0_62 = arith.constant 0 : index
    %119 = vector.load %arg12[%c0_61, %c0_62] : memref<16x128xf32, #tpu.memory_space<vmem>>, vector<16x128xf32>
    tpu.vector_store %arg12[%c0_61, %c0_62], %118 {strides = array<i32>} : memref<16x128xf32, #tpu.memory_space<vmem>>, vector<16x128xf32>,
    return
  }
  func.func @transform_0(%arg0: i32) -> (i32, i32) {
    %c0_i32 = arith.constant 0 : i32
    %c0_i32_0 = arith.constant 0 : i32
    return %arg0, %c0_i32 : i32, i32
  }
  func.func @transform_1(%arg0: i32) -> (i32, i32) {
    %c0_i32 = arith.constant 0 : i32
    %c0_i32_0 = arith.constant 0 : i32
    %c0_i32_1 = arith.constant 0 : i32
    return %c0_i32, %c0_i32_0 : i32, i32
  }
  func.func @transform_2(%arg0: i32) -> (i32, i32) {
    %c0_i32 = arith.constant 0 : i32
    %c0_i32_0 = arith.constant 0 : i32
    %c0_i32_1 = arith.constant 0 : i32
    return %c0_i32, %c0_i32_0 : i32, i32
  }
  func.func @transform_3(%arg0: i32) -> (i32, i32, i32) {
    %c0_i32 = arith.constant 0 : i32
    %c0_i32_0 = arith.constant 0 : i32
    %c0_i32_1 = arith.constant 0 : i32
    %c0_i32_2 = arith.constant 0 : i32
    return %c0_i32, %c0_i32_0, %c0_i32_1 : i32, i32, i32
  }
  func.func @transform_4(%arg0: i32) -> (i32, i32, i32) {
    %c0_i32 = arith.constant 0 : i32
    %c0_i32_0 = arith.constant 0 : i32
    %c0_i32_1 = arith.constant 0 : i32
    %c0_i32_2 = arith.constant 0 : i32
    return %c0_i32, %c0_i32_0, %c0_i32_1 : i32, i32, i32
  }
  func.func @transform_5(%arg0: i32) -> (i32, i32, i32) {
    %c0_i32 = arith.constant 0 : i32
    %c0_i32_0 = arith.constant 0 : i32
    %c0_i32_1 = arith.constant 0 : i32
    %c0_i32_2 = arith.constant 0 : i32
    return %c0_i32, %c0_i32_0, %c0_i32_1 : i32, i32, i32
  }
  func.func @transform_6(%arg0: i32) -> (i32, i32, i32) {
    %c0_i32 = arith.constant 0 : i32
    %c0_i32_0 = arith.constant 0 : i32
    %c0_i32_1 = arith.constant 0 : i32
    %c0_i32_2 = arith.constant 0 : i32
    return %c0_i32, %c0_i32_0, %c0_i32_1 : i32, i32, i32
  }
  func.func @transform_7(%arg0: i32) -> (i32, i32) {
    %c0_i32 = arith.constant 0 : i32
    %c0_i32_0 = arith.constant 0 : i32
    %c0_i32_1 = arith.constant 0 : i32
    return %c0_i32, %c0_i32_0 : i32, i32
  }
  func.func @transform_8(%arg0: i32) -> (i32, i32) {
    %c0_i32 = arith.constant 0 : i32
    %c0_i32_0 = arith.constant 0 : i32
    %c0_i32_1 = arith.constant 0 : i32
    return %c0_i32, %c0_i32_0 : i32, i32
  }
  func.func @transform_9(%arg0: i32) -> (i32, i32) {
    %c0_i32 = arith.constant 0 : i32
    %c0_i32_0 = arith.constant 0 : i32
    %c0_i32_1 = arith.constant 0 : i32
    return %c0_i32, %c0_i32_0 : i32, i32
  }
  func.func @transform_10(%arg0: i32) -> (i32, i32) {
    %c0_i32 = arith.constant 0 : i32
    %c0_i32_0 = arith.constant 0 : i32
    %c0_i32_1 = arith.constant 0 : i32
    return %c0_i32, %c0_i32_0 : i32, i32
  }
  func.func @transform_11(%arg0: i32) -> (i32, i32) {
    %c0_i32 = arith.constant 0 : i32
    %c0_i32_0 = arith.constant 0 : i32
    return %arg0, %c0_i32 : i32, i32
  }
}

module attributes {stable_mosaic.version = 11 : i64} {
  func.func @_gen_kernel(%arg0: i32, %arg1: memref<16x16xf32, #tpu.memory_space<vmem>>, %arg2: memref<16x128xbf16, #tpu.memory_space<vmem>>, %arg3: memref<1x128xf32, #tpu.memory_space<vmem>>, %arg4: memref<2x128x128xbf16, #tpu.memory_space<vmem>>, %arg5: memref<2x1x128xf32, #tpu.memory_space<vmem>>, %arg6: memref<2x1x128xf32, #tpu.memory_space<vmem>>, %arg7: memref<2x1x128xf32, #tpu.memory_space<vmem>>, %arg8: memref<128x128xbf16, #tpu.memory_space<vmem>>, %arg9: memref<1x128xf32, #tpu.memory_space<vmem>>, %arg10: memref<1x128xf32, #tpu.memory_space<vmem>>, %arg11: memref<1x128xf32, #tpu.memory_space<vmem>>, %arg12: memref<16x128xf32, #tpu.memory_space<vmem>>) attributes {dimension_semantics = [#tpu.dimension_semantics<parallel>], iteration_bounds = array<i64: 2>, scalar_prefetch = 0 : i64, scratch_operands = 0 : i64, tpu.core_type = #tpu.core_type<tc>, window_params = [{transform_indices = @transform_0, window_bounds = array<i64: 16, 16>}, {pipeline_mode = #tpu.pipeline_mode<synchronous>, transform_indices = @transform_1, window_bounds = array<i64: 16, 128>}, {pipeline_mode = #tpu.pipeline_mode<synchronous>, transform_indices = @transform_2, window_bounds = array<i64: 1, 128>}, {pipeline_mode = #tpu.pipeline_mode<synchronous>, transform_indices = @transform_3, window_bounds = array<i64: 2, 128, 128>}, {pipeline_mode = #tpu.pipeline_mode<synchronous>, transform_indices = @transform_4, window_bounds = array<i64: 2, 1, 128>}, {pipeline_mode = #tpu.pipeline_mode<synchronous>, transform_indices = @transform_5, window_bounds = array<i64: 2, 1, 128>}, {pipeline_mode = #tpu.pipeline_mode<synchronous>, transform_indices = @transform_6, window_bounds = array<i64: 2, 1, 128>}, {pipeline_mode = #tpu.pipeline_mode<synchronous>, transform_indices = @transform_7, window_bounds = array<i64: 128, 128>}, {pipeline_mode = #tpu.pipeline_mode<synchronous>, transform_indices = @transform_8, window_bounds = array<i64: 1, 128>}, {pipeline_mode = #tpu.pipeline_mode<synchronous>, transform_indices = @transform_9, window_bounds = array<i64: 1, 128>}, {pipeline_mode = #tpu.pipeline_mode<synchronous>, transform_indices = @transform_10, window_bounds = array<i64: 1, 128>}, {transform_indices = @transform_11, window_bounds = array<i64: 16, 128>}]} {
    %c0 = arith.constant 0 : index
    %c0_0 = arith.constant 0 : index
    %0 = vector.load %arg2[%c0, %c0_0] : memref<16x128xbf16, #tpu.memory_space<vmem>>, vector<16x128xbf16>
    %c0_1 = arith.constant 0 : index
    %c0_2 = arith.constant 0 : index
    %1 = vector.load %arg1[%c0_1, %c0_2] : memref<16x16xf32, #tpu.memory_space<vmem>>, vector<16x16xf32>
    %2 = arith.truncf %1 : vector<16x16xf32> to vector<16x16xbf16>
    %cst = arith.constant dense<0.000000e+00> : vector<16x128xf32>
    %3 = tpu.matmul %2, %0, %cst {dimension_numbers = #tpu.dot_dimension_numbers<[1], [0], [0], [1], [0, 0, 1, 1], [], []>} : vector<16x16xbf16>, vector<16x128xbf16>, vector<16x128xf32> -> vector<16x128xf32>
    %c0_3 = arith.constant 0 : index
    %c0_4 = arith.constant 0 : index
    %4 = vector.load %arg3[%c0_3, %c0_4] : memref<1x128xf32, #tpu.memory_space<vmem>>, vector<1x128xf32>
    %5 = vector.broadcast %4 : vector<1x128xf32> to vector<16x128xf32>
    %6 = arith.addf %3, %5 : vector<16x128xf32>
    %7 = math.exp %6 : vector<16x128xf32>
    %cst_5 = arith.constant 1.000000e+00 : f32
    %8 = vector.broadcast %cst_5 : f32 to vector<16x128xf32>
    %9 = arith.addf %8, %7 : vector<16x128xf32>
    %10 = arith.mulf %9, %9 : vector<16x128xf32>
    %cst_6 = arith.constant 1.000000e+00 : f32
    %11 = vector.broadcast %cst_6 : f32 to vector<16x128xf32>
    %12 = arith.addf %10, %11 : vector<16x128xf32>
    %13 = tpu.reciprocal %12 : vector<16x128xf32> -> vector<16x128xf32>
    %cst_7 = arith.constant 2.000000e+00 : f32
    %14 = vector.broadcast %cst_7 : f32 to vector<16x128xf32>
    %15 = arith.mulf %14, %13 : vector<16x128xf32>
    %cst_8 = arith.constant 1.000000e+00 : f32
    %16 = vector.broadcast %cst_8 : f32 to vector<16x128xf32>
    %17 = arith.subf %16, %15 : vector<16x128xf32>
    %18 = arith.mulf %6, %17 : vector<16x128xf32>
    %c0_9 = arith.constant 0 : index
    %c0_10 = arith.constant 0 : index
    %c0_11 = arith.constant 0 : index
    %19 = vector.load %arg4[%c0_9, %c0_10, %c0_11] : memref<2x128x128xbf16, #tpu.memory_space<vmem>>, vector<1x128x128xbf16>
    %20 = vector.shape_cast %19 : vector<1x128x128xbf16> to vector<128x128xbf16>
    %21 = arith.truncf %18 : vector<16x128xf32> to vector<16x128xbf16>
    %cst_12 = arith.constant dense<0.000000e+00> : vector<16x128xf32>
    %22 = tpu.matmul %21, %20, %cst_12 {dimension_numbers = #tpu.dot_dimension_numbers<[1], [0], [0], [1], [0, 0, 1, 1], [], []>} : vector<16x128xbf16>, vector<128x128xbf16>, vector<16x128xf32> -> vector<16x128xf32>
    %c0_13 = arith.constant 0 : index
    %c0_14 = arith.constant 0 : index
    %c0_15 = arith.constant 0 : index
    %23 = vector.load %arg5[%c0_13, %c0_14, %c0_15] : memref<2x1x128xf32, #tpu.memory_space<vmem>>, vector<1x1x128xf32>
    %24 = vector.shape_cast %23 : vector<1x1x128xf32> to vector<1x128xf32>
    %25 = vector.broadcast %24 : vector<1x128xf32> to vector<16x128xf32>
    %26 = arith.addf %22, %25 : vector<16x128xf32>
    %c0_16 = arith.constant 0 : index
    %c0_17 = arith.constant 0 : index
    %c0_18 = arith.constant 0 : index
    %27 = vector.load %arg6[%c0_16, %c0_17, %c0_18] : memref<2x1x128xf32, #tpu.memory_space<vmem>>, vector<1x1x128xf32>
    %28 = vector.shape_cast %27 : vector<1x1x128xf32> to vector<1x128xf32>
    %c0_19 = arith.constant 0 : index
    %c0_20 = arith.constant 0 : index
    %c0_21 = arith.constant 0 : index
    %29 = vector.load %arg7[%c0_19, %c0_20, %c0_21] : memref<2x1x128xf32, #tpu.memory_space<vmem>>, vector<1x1x128xf32>
    %30 = vector.shape_cast %29 : vector<1x1x128xf32> to vector<1x128xf32>
    %cst_22 = arith.constant dense<0.000000e+00> : vector<16xf32>
    %31 = vector.multi_reduction <add>, %26, %cst_22 [1] : vector<16x128xf32> to vector<16xf32>
    %32 = vector.shape_cast %31 : vector<16xf32> to vector<16x1xf32>
    %cst_23 = arith.constant 1.280000e+02 : f32
    %33 = vector.broadcast %cst_23 : f32 to vector<16x1xf32>
    %34 = arith.divf %32, %33 : vector<16x1xf32>
    %35 = vector.broadcast %34 : vector<16x1xf32> to vector<16x128xf32>
    %36 = arith.subf %26, %35 : vector<16x128xf32>
    %37 = arith.mulf %36, %36 : vector<16x128xf32>
    %cst_24 = arith.constant dense<0.000000e+00> : vector<16xf32>
    %38 = vector.multi_reduction <add>, %37, %cst_24 [1] : vector<16x128xf32> to vector<16xf32>
    %39 = vector.shape_cast %38 : vector<16xf32> to vector<16x1xf32>
    %cst_25 = arith.constant 1.280000e+02 : f32
    %40 = vector.broadcast %cst_25 : f32 to vector<16x1xf32>
    %41 = arith.divf %39, %40 : vector<16x1xf32>
    %cst_26 = arith.constant 9.99999974E-6 : f32
    %42 = vector.broadcast %cst_26 : f32 to vector<16x1xf32>
    %43 = arith.addf %41, %42 : vector<16x1xf32>
    %44 = math.rsqrt %43 : vector<16x1xf32>
    %45 = vector.broadcast %44 : vector<16x1xf32> to vector<16x128xf32>
    %46 = arith.mulf %36, %45 : vector<16x128xf32>
    %47 = vector.broadcast %28 : vector<1x128xf32> to vector<16x128xf32>
    %48 = arith.mulf %46, %47 : vector<16x128xf32>
    %49 = vector.broadcast %30 : vector<1x128xf32> to vector<16x128xf32>
    %50 = arith.addf %48, %49 : vector<16x128xf32>
    %51 = math.exp %50 : vector<16x128xf32>
    %cst_27 = arith.constant 1.000000e+00 : f32
    %52 = vector.broadcast %cst_27 : f32 to vector<16x128xf32>
    %53 = arith.addf %52, %51 : vector<16x128xf32>
    %54 = arith.mulf %53, %53 : vector<16x128xf32>
    %cst_28 = arith.constant 1.000000e+00 : f32
    %55 = vector.broadcast %cst_28 : f32 to vector<16x128xf32>
    %56 = arith.addf %54, %55 : vector<16x128xf32>
    %57 = tpu.reciprocal %56 : vector<16x128xf32> -> vector<16x128xf32>
    %cst_29 = arith.constant 2.000000e+00 : f32
    %58 = vector.broadcast %cst_29 : f32 to vector<16x128xf32>
    %59 = arith.mulf %58, %57 : vector<16x128xf32>
    %cst_30 = arith.constant 1.000000e+00 : f32
    %60 = vector.broadcast %cst_30 : f32 to vector<16x128xf32>
    %61 = arith.subf %60, %59 : vector<16x128xf32>
    %62 = arith.mulf %50, %61 : vector<16x128xf32>
    %c1 = arith.constant 1 : index
    %c0_31 = arith.constant 0 : index
    %c0_32 = arith.constant 0 : index
    %63 = vector.load %arg4[%c1, %c0_31, %c0_32] : memref<2x128x128xbf16, #tpu.memory_space<vmem>>, vector<1x128x128xbf16>
    %64 = vector.shape_cast %63 : vector<1x128x128xbf16> to vector<128x128xbf16>
    %65 = arith.truncf %62 : vector<16x128xf32> to vector<16x128xbf16>
    %cst_33 = arith.constant dense<0.000000e+00> : vector<16x128xf32>
    %66 = tpu.matmul %65, %64, %cst_33 {dimension_numbers = #tpu.dot_dimension_numbers<[1], [0], [0], [1], [0, 0, 1, 1], [], []>} : vector<16x128xbf16>, vector<128x128xbf16>, vector<16x128xf32> -> vector<16x128xf32>
    %c1_34 = arith.constant 1 : index
    %c0_35 = arith.constant 0 : index
    %c0_36 = arith.constant 0 : index
    %67 = vector.load %arg5[%c1_34, %c0_35, %c0_36] : memref<2x1x128xf32, #tpu.memory_space<vmem>>, vector<1x1x128xf32>
    %68 = vector.shape_cast %67 : vector<1x1x128xf32> to vector<1x128xf32>
    %69 = vector.broadcast %68 : vector<1x128xf32> to vector<16x128xf32>
    %70 = arith.addf %66, %69 : vector<16x128xf32>
    %c1_37 = arith.constant 1 : index
    %c0_38 = arith.constant 0 : index
    %c0_39 = arith.constant 0 : index
    %71 = vector.load %arg6[%c1_37, %c0_38, %c0_39] : memref<2x1x128xf32, #tpu.memory_space<vmem>>, vector<1x1x128xf32>
    %72 = vector.shape_cast %71 : vector<1x1x128xf32> to vector<1x128xf32>
    %c1_40 = arith.constant 1 : index
    %c0_41 = arith.constant 0 : index
    %c0_42 = arith.constant 0 : index
    %73 = vector.load %arg7[%c1_40, %c0_41, %c0_42] : memref<2x1x128xf32, #tpu.memory_space<vmem>>, vector<1x1x128xf32>
    %74 = vector.shape_cast %73 : vector<1x1x128xf32> to vector<1x128xf32>
    %cst_43 = arith.constant dense<0.000000e+00> : vector<16xf32>
    %75 = vector.multi_reduction <add>, %70, %cst_43 [1] : vector<16x128xf32> to vector<16xf32>
    %76 = vector.shape_cast %75 : vector<16xf32> to vector<16x1xf32>
    %cst_44 = arith.constant 1.280000e+02 : f32
    %77 = vector.broadcast %cst_44 : f32 to vector<16x1xf32>
    %78 = arith.divf %76, %77 : vector<16x1xf32>
    %79 = vector.broadcast %78 : vector<16x1xf32> to vector<16x128xf32>
    %80 = arith.subf %70, %79 : vector<16x128xf32>
    %81 = arith.mulf %80, %80 : vector<16x128xf32>
    %cst_45 = arith.constant dense<0.000000e+00> : vector<16xf32>
    %82 = vector.multi_reduction <add>, %81, %cst_45 [1] : vector<16x128xf32> to vector<16xf32>
    %83 = vector.shape_cast %82 : vector<16xf32> to vector<16x1xf32>
    %cst_46 = arith.constant 1.280000e+02 : f32
    %84 = vector.broadcast %cst_46 : f32 to vector<16x1xf32>
    %85 = arith.divf %83, %84 : vector<16x1xf32>
    %cst_47 = arith.constant 9.99999974E-6 : f32
    %86 = vector.broadcast %cst_47 : f32 to vector<16x1xf32>
    %87 = arith.addf %85, %86 : vector<16x1xf32>
    %88 = math.rsqrt %87 : vector<16x1xf32>
    %89 = vector.broadcast %88 : vector<16x1xf32> to vector<16x128xf32>
    %90 = arith.mulf %80, %89 : vector<16x128xf32>
    %91 = vector.broadcast %72 : vector<1x128xf32> to vector<16x128xf32>
    %92 = arith.mulf %90, %91 : vector<16x128xf32>
    %93 = vector.broadcast %74 : vector<1x128xf32> to vector<16x128xf32>
    %94 = arith.addf %92, %93 : vector<16x128xf32>
    %95 = math.exp %94 : vector<16x128xf32>
    %cst_48 = arith.constant 1.000000e+00 : f32
    %96 = vector.broadcast %cst_48 : f32 to vector<16x128xf32>
    %97 = arith.addf %96, %95 : vector<16x128xf32>
    %98 = arith.mulf %97, %97 : vector<16x128xf32>
    %cst_49 = arith.constant 1.000000e+00 : f32
    %99 = vector.broadcast %cst_49 : f32 to vector<16x128xf32>
    %100 = arith.addf %98, %99 : vector<16x128xf32>
    %101 = tpu.reciprocal %100 : vector<16x128xf32> -> vector<16x128xf32>
    %cst_50 = arith.constant 2.000000e+00 : f32
    %102 = vector.broadcast %cst_50 : f32 to vector<16x128xf32>
    %103 = arith.mulf %102, %101 : vector<16x128xf32>
    %cst_51 = arith.constant 1.000000e+00 : f32
    %104 = vector.broadcast %cst_51 : f32 to vector<16x128xf32>
    %105 = arith.subf %104, %103 : vector<16x128xf32>
    %106 = arith.mulf %94, %105 : vector<16x128xf32>
    %c0_52 = arith.constant 0 : index
    %c0_53 = arith.constant 0 : index
    %107 = vector.load %arg8[%c0_52, %c0_53] : memref<128x128xbf16, #tpu.memory_space<vmem>>, vector<128x128xbf16>
    %108 = arith.truncf %106 : vector<16x128xf32> to vector<16x128xbf16>
    %cst_54 = arith.constant dense<0.000000e+00> : vector<16x128xf32>
    %109 = tpu.matmul %108, %107, %cst_54 {dimension_numbers = #tpu.dot_dimension_numbers<[1], [0], [0], [1], [0, 0, 1, 1], [], []>} : vector<16x128xbf16>, vector<128x128xbf16>, vector<16x128xf32> -> vector<16x128xf32>
    %c0_55 = arith.constant 0 : index
    %c0_56 = arith.constant 0 : index
    %110 = vector.load %arg9[%c0_55, %c0_56] : memref<1x128xf32, #tpu.memory_space<vmem>>, vector<1x128xf32>
    %111 = vector.broadcast %110 : vector<1x128xf32> to vector<16x128xf32>
    %112 = arith.addf %109, %111 : vector<16x128xf32>
    %c0_57 = arith.constant 0 : index
    %c0_58 = arith.constant 0 : index
    %113 = vector.load %arg10[%c0_57, %c0_58] : memref<1x128xf32, #tpu.memory_space<vmem>>, vector<1x128xf32>
    %114 = vector.broadcast %113 : vector<1x128xf32> to vector<16x128xf32>
    %115 = arith.maximumf %112, %114 : vector<16x128xf32>
    %c0_59 = arith.constant 0 : index
    %c0_60 = arith.constant 0 : index
    %116 = vector.load %arg11[%c0_59, %c0_60] : memref<1x128xf32, #tpu.memory_space<vmem>>, vector<1x128xf32>
    %117 = vector.broadcast %116 : vector<1x128xf32> to vector<16x128xf32>
    %118 = arith.minimumf %115, %117 : vector<16x128xf32>
    %c0_61 = arith.constant 0 : index
    %c0_62 = arith.constant 0 : index
    %119 = vector.load %arg12[%c0_61, %c0_62] : memref<16x128xf32, #tpu.memory_space<vmem>>, vector<16x128xf32>
    tpu.vector_store %arg12[%c0_61, %c0_62], %118 {strides = array<i32>} : memref<16x128xf32, #tpu.memory_space<vmem>>, vector<16x128xf32>,
    return
  }
  func.func @transform_0(%arg0: i32) -> (i32, i32) {
    %c0_i32 = arith.constant 0 : i32
    %c0_i32_0 = arith.constant 0 : i32
    return %arg0, %c0_i32 : i32, i32
  }
  func.func @transform_1(%arg0: i32) -> (i32, i32) {
    %c0_i32 = arith.constant 0 : i32
    %c0_i32_0 = arith.constant 0 : i32
    %c0_i32_1 = arith.constant 0 : i32
    return %c0_i32, %c0_i32_0 : i32, i32
  }
  func.func @transform_2(%arg0: i32) -> (i32, i32) {
    %c0_i32 = arith.constant 0 : i32
    %c0_i32_0 = arith.constant 0 : i32
    %c0_i32_1 = arith.constant 0 : i32
    return %c0_i32, %c0_i32_0 : i32, i32
  }
  func.func @transform_3(%arg0: i32) -> (i32, i32, i32) {
    %c0_i32 = arith.constant 0 : i32
    %c0_i32_0 = arith.constant 0 : i32
    %c0_i32_1 = arith.constant 0 : i32
    %c0_i32_2 = arith.constant 0 : i32
    return %c0_i32, %c0_i32_0, %c0_i32_1 : i32, i32, i32
  }
  func.func @transform_4(%arg0: i32) -> (i32, i32, i32) {
    %c0_i32 = arith.constant 0 : i32
    %c0_i32_0 = arith.constant 0 : i32
    %c0_i32_1 = arith.constant 0 : i32
    %c0_i32_2 = arith.constant 0 : i32
    return %c0_i32, %c0_i32_0, %c0_i32_1 : i32, i32, i32
  }
  func.func @transform_5(%arg0: i32) -> (i32, i32, i32) {
    %c0_i32 = arith.constant 0 : i32
    %c0_i32_0 = arith.constant 0 : i32
    %c0_i32_1 = arith.constant 0 : i32
    %c0_i32_2 = arith.constant 0 : i32
    return %c0_i32, %c0_i32_0, %c0_i32_1 : i32, i32, i32
  }
  func.func @transform_6(%arg0: i32) -> (i32, i32, i32) {
    %c0_i32 = arith.constant 0 : i32
    %c0_i32_0 = arith.constant 0 : i32
    %c0_i32_1 = arith.constant 0 : i32
    %c0_i32_2 = arith.constant 0 : i32
    return %c0_i32, %c0_i32_0, %c0_i32_1 : i32, i32, i32
  }
  func.func @transform_7(%arg0: i32) -> (i32, i32) {
    %c0_i32 = arith.constant 0 : i32
    %c0_i32_0 = arith.constant 0 : i32
    %c0_i32_1 = arith.constant 0 : i32
    return %c0_i32, %c0_i32_0 : i32, i32
  }
  func.func @transform_8(%arg0: i32) -> (i32, i32) {
    %c0_i32 = arith.constant 0 : i32
    %c0_i32_0 = arith.constant 0 : i32
    %c0_i32_1 = arith.constant 0 : i32
    return %c0_i32, %c0_i32_0 : i32, i32
  }
  func.func @transform_9(%arg0: i32) -> (i32, i32) {
    %c0_i32 = arith.constant 0 : i32
    %c0_i32_0 = arith.constant 0 : i32
    %c0_i32_1 = arith.constant 0 : i32
    return %c0_i32, %c0_i32_0 : i32, i32
  }
  func.func @transform_10(%arg0: i32) -> (i32, i32) {
    %c0_i32 = arith.constant 0 : i32
    %c0_i32_0 = arith.constant 0 : i32
    %c0_i32_1 = arith.constant 0 : i32
    return %c0_i32, %c0_i32_0 : i32, i32
  }
  func.func @transform_11(%arg0: i32) -> (i32, i32) {
    %c0_i32 = arith.constant 0 : i32
    %c0_i32_0 = arith.constant 0 : i32
    return %arg0, %c0_i32 : i32, i32
  }
}

</mosaic_0001>

<llo_original>
// kernel: tpu_custom_call.1
$region0: #{tpu_custom_call.1}
  #allocation0 [shape = 'u32[]', space=smem, size = 0x4, offset = 0x4, fixed_abs, tag = 'smem constant byte address 0x4 - core index']
  #allocation1 [shape = 'u32[72,128]{1,0:T(1,128)}', space=vmem, size = 0x9000, scoped, tag = 'internal scratch']
  %s0 = inlined_call_operand.vmem [shape: f32[32,16], index: 0, kind: input, shape index: {}]
  %s1 = inlined_call_operand.vmem [shape: bf16[16,128], index: 1, kind: input, shape index: {}]
  %s2 = inlined_call_operand.vmem [shape: f32[1,128], index: 2, kind: input, shape index: {}]
  %s3 = inlined_call_operand.hbm [shape: bf16[2,128,128], index: 3, kind: input, shape index: {}]
  %s4 = inlined_call_operand.vmem [shape: f32[2,1,128], index: 4, kind: input, shape index: {}]
  %s5 = inlined_call_operand.vmem [shape: f32[2,1,128], index: 5, kind: input, shape index: {}]
  %s6 = inlined_call_operand.vmem [shape: f32[2,1,128], index: 6, kind: input, shape index: {}]
  %s7 = inlined_call_operand.hbm [shape: bf16[128,128], index: 7, kind: input, shape index: {}]
  %s8 = inlined_call_operand.vmem [shape: f32[1,128], index: 8, kind: input, shape index: {}]
  %s9 = inlined_call_operand.vmem [shape: f32[1,128], index: 9, kind: input, shape index: {}]
  %s10 = inlined_call_operand.vmem [shape: f32[1,128], index: 10, kind: input, shape index: {}]
  %s11 = inlined_call_operand.hbm [shape: f32[32,128], index: 11, kind: output, shape index: {}]
  %s12 = sld [smem:[#allocation0]]
  $region85: #{tpu_custom_call.1} parent=0
    _
  %s14 = ssub.s32 1, %s12
  %s15 = scalar_select 0, %s14, %s12
  $region1: #{tpu_custom_call.1} parent=0
    #allocation2 [shape = 'u8[65536]{0}', space=vmem, size = 0x10000, scoped, tag = 'input window, operand 3, single buffered']
    #allocation3 [shape = 's32[2]{0}', space=sflag, size = 0x8, scoped, tag = 'scoped memory for tpu_custom_call.1']
    #allocation4 [shape = 's32[2]{0}', space=sflag, size = 0x8, scoped, tag = 'scoped memory for tpu_custom_call.1']
    #allocation5 [shape = 'u8[32768]{0}', space=vmem, size = 0x8000, scoped, tag = 'input window, operand 7, single buffered']
    #allocation6 [shape = 's32[1]{0}', space=sflag, size = 0x4, scoped, tag = 'scoped memory for tpu_custom_call.1']
    #allocation7 [shape = 'u8[16384]{0}', space=vmem, size = 0x4000, scoped, tag = 'output window, operand 0']
    %16 = vsyncpa [#allocation3], 0
    %17 = vsyncpa [#allocation6], 0
    %18 = vsyncpa [#allocation4], 0
    %s19 = scalar_lea.sflag [#allocation4], 1
    %20 = vsyncpa %s19, 0
    loop: start=0, step=1, limit=4
    $region2: #{tpu_custom_call.1} parent=1 // loop_pre_header
      _
    $region3: #{tpu_custom_call.1} parent=1 // loop_header
      %s22 = sphi 0, %s26
      %p23 = scmp.ge.s32.totalorder %s22, 4
      %s32 = sphi 0, %s34
      %s35 = sphi 0, %s32
      %s36 = sphi 0, %s35
      %s52 = sphi 0, %s36
      %s56 = sphi 0, %s56
      %s58 = sphi 0, %s56
      %s59 = sphi 0, %s58
      %s73 = sphi 0, %s59
      %s77 = sphi 0, %s77
      %s79 = sphi 0, %s77
      %s80 = sphi 0, %s79
      %s94 = sphi 0, %s80
      %s98 = sphi 0, %s98
      %s100 = sphi 0, %s98
      %s101 = sphi 0, %s100
      %s115 = sphi 0, %s101
      %s119 = sphi 0, %s119
      %s121 = sphi 0, %s119
      %s122 = sphi 0, %s121
      %s136 = sphi 0, %s122
      %s140 = sphi 0, %s140
      %s142 = sphi 0, %s140
      %s143 = sphi 0, %s142
      %s157 = sphi 0, %s143
      %s161 = sphi 0, %s161
      %s163 = sphi 0, %s161
      %s164 = sphi 0, %s163
      %s178 = sphi 0, %s164
      %s182 = sphi 0, %s182
      %s184 = sphi 0, %s182
      %s185 = sphi 0, %s184
      %s199 = sphi 0, %s185
      %s203 = sphi 0, %s203
      %s205 = sphi 0, %s203
      %s206 = sphi 0, %s205
      %s220 = sphi 0, %s206
      %s224 = sphi 0, %s224
      %s226 = sphi 0, %s224
      %s227 = sphi 0, %s226
      %s241 = sphi 0, %s227
      %s245 = sphi 0, %s245
      %s247 = sphi 0, %s245
      %s248 = sphi 0, %s247
      %s262 = sphi 0, %s248
      %s268 = sphi 0, %s270
      %s271 = sphi 0, %s268
      %s272 = sphi 0, %s271
      %s288 = sphi 0, %s272
    $region4: #{tpu_custom_call.1} parent=1 // loop_header_branch
      %25 = sbr.rel (%p23) target = $region8
    $region5: #{tpu_custom_call.1} parent=1 // loop_body
      %s27 = ssub.s32 %s22, 1
      %s28 = ssub.s32 %s22, 2
      %s29 = sadd.s32 %s22, 1
      %s30 = ssub.s32 %s22, %s29
      %p31 = scmp.eq.s32.totalorder %s30, 0
      %s33 = sadd.s32 %s32, 1
      %s34 = scalar_select %p31, %s32, %s33
      %p37 = pneg %p31
      %p38 = scmp.eq.s32.totalorder %s22, 1
      %p39 = por %p37, %p38
      %p40 = scmp.ne.s32.totalorder %s32, %s35
      %p41 = scmp.eq.s32.totalorder %s22, 0
      %p42 = por %p40, %p41
      %p43 = scmp.ne.s32.totalorder %s32, %s35
      %p44 = scmp.eq.s32.totalorder %s27, 1
      %p45 = por %p43, %p44
      %p46 = scmp.ne.s32.totalorder %s35, %s36
      %p47 = scmp.eq.s32.totalorder %s27, 0
      %p48 = por %p46, %p47
      %p49 = scmp.ne.s32.totalorder %s35, %s36
      %p50 = scmp.eq.s32.totalorder %s28, 1
      %p51 = por %p49, %p50
      %p53 = scmp.ne.s32.totalorder %s36, %s52
      %p54 = scmp.eq.s32.totalorder %s28, 0
      %p55 = por %p53, %p54
      %s57 = sadd.s32 %s56, 1
      %p60 = scmp.eq.s32.totalorder %s22, 1
      %p61 = scmp.ne.s32.totalorder %s56, %s58
      %p62 = scmp.eq.s32.totalorder %s22, 0
      %p63 = por %p61, %p62
      %p64 = scmp.ne.s32.totalorder %s56, %s58
      %p65 = scmp.eq.s32.totalorder %s27, 1
      %p66 = por %p64, %p65
      %p67 = scmp.ne.s32.totalorder %s58, %s59
      %p68 = scmp.eq.s32.totalorder %s27, 0
      %p69 = por %p67, %p68
      %p70 = scmp.ne.s32.totalorder %s58, %s59
      %p71 = scmp.eq.s32.totalorder %s28, 1
      %p72 = por %p70, %p71
      %p74 = scmp.ne.s32.totalorder %s59, %s73
      %p75 = scmp.eq.s32.totalorder %s28, 0
      %p76 = por %p74, %p75
      %s78 = sadd.s32 %s77, 1
      %p81 = scmp.eq.s32.totalorder %s22, 1
      %p82 = scmp.ne.s32.totalorder %s77, %s79
      %p83 = scmp.eq.s32.totalorder %s22, 0
      %p84 = por %p82, %p83
      %p85 = scmp.ne.s32.totalorder %s77, %s79
      %p86 = scmp.eq.s32.totalorder %s27, 1
      %p87 = por %p85, %p86
      %p88 = scmp.ne.s32.totalorder %s79, %s80
      %p89 = scmp.eq.s32.totalorder %s27, 0
      %p90 = por %p88, %p89
      %p91 = scmp.ne.s32.totalorder %s79, %s80
      %p92 = scmp.eq.s32.totalorder %s28, 1
      %p93 = por %p91, %p92
      %p95 = scmp.ne.s32.totalorder %s80, %s94
      %p96 = scmp.eq.s32.totalorder %s28, 0
      %p97 = por %p95, %p96
      %s99 = sadd.s32 %s98, 1
      %p102 = scmp.eq.s32.totalorder %s22, 1
      %p103 = scmp.ne.s32.totalorder %s98, %s100
      %p104 = scmp.eq.s32.totalorder %s22, 0
      %p105 = por %p103, %p104
      %p106 = scmp.ne.s32.totalorder %s98, %s100
      %p107 = scmp.eq.s32.totalorder %s27, 1
      %p108 = por %p106, %p107
      %p109 = scmp.ne.s32.totalorder %s100, %s101
      %p110 = scmp.eq.s32.totalorder %s27, 0
      %p111 = por %p109, %p110
      %p112 = scmp.ne.s32.totalorder %s100, %s101
      %p113 = scmp.eq.s32.totalorder %s28, 1
      %p114 = por %p112, %p113
      %p116 = scmp.ne.s32.totalorder %s101, %s115
      %p117 = scmp.eq.s32.totalorder %s28, 0
      %p118 = por %p116, %p117
      %s120 = sadd.s32 %s119, 1
      %p123 = scmp.eq.s32.totalorder %s22, 1
      %p124 = scmp.ne.s32.totalorder %s119, %s121
      %p125 = scmp.eq.s32.totalorder %s22, 0
      %p126 = por %p124, %p125
      %p127 = scmp.ne.s32.totalorder %s119, %s121
      %p128 = scmp.eq.s32.totalorder %s27, 1
      %p129 = por %p127, %p128
      %p130 = scmp.ne.s32.totalorder %s121, %s122
      %p131 = scmp.eq.s32.totalorder %s27, 0
      %p132 = por %p130, %p131
      %p133 = scmp.ne.s32.totalorder %s121, %s122
      %p134 = scmp.eq.s32.totalorder %s28, 1
      %p135 = por %p133, %p134
      %p137 = scmp.ne.s32.totalorder %s122, %s136
      %p138 = scmp.eq.s32.totalorder %s28, 0
      %p139 = por %p137, %p138
      %s141 = sadd.s32 %s140, 1
      %p144 = scmp.eq.s32.totalorder %s22, 1
      %p145 = scmp.ne.s32.totalorder %s140, %s142
      %p146 = scmp.eq.s32.totalorder %s22, 0
      %p147 = por %p145, %p146
      %p148 = scmp.ne.s32.totalorder %s140, %s142
      %p149 = scmp.eq.s32.totalorder %s27, 1
      %p150 = por %p148, %p149
      %p151 = scmp.ne.s32.totalorder %s142, %s143
      %p152 = scmp.eq.s32.totalorder %s27, 0
      %p153 = por %p151, %p152
      %p154 = scmp.ne.s32.totalorder %s142, %s143
      %p155 = scmp.eq.s32.totalorder %s28, 1
      %p156 = por %p154, %p155
      %p158 = scmp.ne.s32.totalorder %s143, %s157
      %p159 = scmp.eq.s32.totalorder %s28, 0
      %p160 = por %p158, %p159
      %s162 = sadd.s32 %s161, 1
      %p165 = scmp.eq.s32.totalorder %s22, 1
      %p166 = scmp.ne.s32.totalorder %s161, %s163
      %p167 = scmp.eq.s32.totalorder %s22, 0
      %p168 = por %p166, %p167
      %p169 = scmp.ne.s32.totalorder %s161, %s163
      %p170 = scmp.eq.s32.totalorder %s27, 1
      %p171 = por %p169, %p170
      %p172 = scmp.ne.s32.totalorder %s163, %s164
      %p173 = scmp.eq.s32.totalorder %s27, 0
      %p174 = por %p172, %p173
      %p175 = scmp.ne.s32.totalorder %s163, %s164
      %p176 = scmp.eq.s32.totalorder %s28, 1
      %p177 = por %p175, %p176
      %p179 = scmp.ne.s32.totalorder %s164, %s178
      %p180 = scmp.eq.s32.totalorder %s28, 0
      %p181 = por %p179, %p180
      %s183 = sadd.s32 %s182, 1
      %p186 = scmp.eq.s32.totalorder %s22, 1
      %p187 = scmp.ne.s32.totalorder %s182, %s184
      %p188 = scmp.eq.s32.totalorder %s22, 0
      %p189 = por %p187, %p188
      %p190 = scmp.ne.s32.totalorder %s182, %s184
      %p191 = scmp.eq.s32.totalorder %s27, 1
      %p192 = por %p190, %p191
      %p193 = scmp.ne.s32.totalorder %s184, %s185
      %p194 = scmp.eq.s32.totalorder %s27, 0
      %p195 = por %p193, %p194
      %p196 = scmp.ne.s32.totalorder %s184, %s185
      %p197 = scmp.eq.s32.totalorder %s28, 1
      %p198 = por %p196, %p197
      %p200 = scmp.ne.s32.totalorder %s185, %s199
      %p201 = scmp.eq.s32.totalorder %s28, 0
      %p202 = por %p200, %p201
      %s204 = sadd.s32 %s203, 1
      %p207 = scmp.eq.s32.totalorder %s22, 1
      %p208 = scmp.ne.s32.totalorder %s203, %s205
      %p209 = scmp.eq.s32.totalorder %s22, 0
      %p210 = por %p208, %p209
      %p211 = scmp.ne.s32.totalorder %s203, %s205
      %p212 = scmp.eq.s32.totalorder %s27, 1
      %p213 = por %p211, %p212
      %p214 = scmp.ne.s32.totalorder %s205, %s206
      %p215 = scmp.eq.s32.totalorder %s27, 0
      %p216 = por %p214, %p215
      %p217 = scmp.ne.s32.totalorder %s205, %s206
      %p218 = scmp.eq.s32.totalorder %s28, 1
      %p219 = por %p217, %p218
      %p221 = scmp.ne.s32.totalorder %s206, %s220
      %p222 = scmp.eq.s32.totalorder %s28, 0
      %p223 = por %p221, %p222
      %s225 = sadd.s32 %s224, 1
      %p228 = scmp.eq.s32.totalorder %s22, 1
      %p229 = scmp.ne.s32.totalorder %s224, %s226
      %p230 = scmp.eq.s32.totalorder %s22, 0
      %p231 = por %p229, %p230
      %p232 = scmp.ne.s32.totalorder %s224, %s226
      %p233 = scmp.eq.s32.totalorder %s27, 1
      %p234 = por %p232, %p233
      %p235 = scmp.ne.s32.totalorder %s226, %s227
      %p236 = scmp.eq.s32.totalorder %s27, 0
      %p237 = por %p235, %p236
      %p238 = scmp.ne.s32.totalorder %s226, %s227
      %p239 = scmp.eq.s32.totalorder %s28, 1
      %p240 = por %p238, %p239
      %p242 = scmp.ne.s32.totalorder %s227, %s241
      %p243 = scmp.eq.s32.totalorder %s28, 0
      %p244 = por %p242, %p243
      %s246 = sadd.s32 %s245, 1
      %p249 = scmp.eq.s32.totalorder %s22, 1
      %p250 = scmp.ne.s32.totalorder %s245, %s247
      %p251 = scmp.eq.s32.totalorder %s22, 0
      %p252 = por %p250, %p251
      %p253 = scmp.ne.s32.totalorder %s245, %s247
      %p254 = scmp.eq.s32.totalorder %s27, 1
      %p255 = por %p253, %p254
      %p256 = scmp.ne.s32.totalorder %s247, %s248
      %p257 = scmp.eq.s32.totalorder %s27, 0
      %p258 = por %p256, %p257
      %p259 = scmp.ne.s32.totalorder %s247, %s248
      %p260 = scmp.eq.s32.totalorder %s28, 1
      %p261 = por %p259, %p260
      %p263 = scmp.ne.s32.totalorder %s248, %s262
      %p264 = scmp.eq.s32.totalorder %s28, 0
      %p265 = por %p263, %p264
      %s266 = ssub.s32 %s22, %s29
      %p267 = scmp.eq.s32.totalorder %s266, 0
      %s269 = sadd.s32 %s268, 1
      %s270 = scalar_select %p267, %s268, %s269
      %p273 = pneg %p267
      %p274 = scmp.eq.s32.totalorder %s22, 1
      %p275 = por %p273, %p274
      %p276 = scmp.ne.s32.totalorder %s268, %s271
      %p277 = scmp.eq.s32.totalorder %s22, 0
      %p278 = por %p276, %p277
      %p279 = scmp.ne.s32.totalorder %s268, %s271
      %p280 = scmp.eq.s32.totalorder %s27, 1
      %p281 = por %p279, %p280
      %p282 = scmp.ne.s32.totalorder %s271, %s272
      %p283 = scmp.eq.s32.totalorder %s27, 0
      %p284 = por %p282, %p283
      %p285 = scmp.ne.s32.totalorder %s271, %s272
      %p286 = scmp.eq.s32.totalorder %s28, 1
      %p287 = por %p285, %p286
      %p289 = scmp.ne.s32.totalorder %s272, %s288
      %p290 = scmp.eq.s32.totalorder %s28, 0
      %p291 = por %p289, %p290
      %p292 = scmp.le.s32.totalorder 1, %s22
      %p293 = scmp.lt.s32.totalorder %s22, 3
      %p294 = pnand %p292, %p293
      %p295 = pneg %p294
      // Predicated region
      $region9: #{tpu_custom_call.1} parent=5 // pred_check
        _
      $region10: #{tpu_custom_call.1} parent=5 // pred_check_branch
        %297 = sbr.rel (%p294) target = $region12
      $region11: #{tpu_custom_call.1} parent=5 // pred_region
        %s298 = ssub.s32 %s22, 1
        // Predicated region
        $region13: #{tpu_custom_call.1} parent=11 // pred_check
          %p299 = pneg %p69
        $region14: #{tpu_custom_call.1} parent=11 // pred_check_branch
          %301 = sbr.rel (%p299) target = $region16
        $region15: #{tpu_custom_call.1} parent=11 // pred_region
          _
        $region16: #{tpu_custom_call.1} parent=11 // pred_fallthru
          _
        // Predicated region
        $region17: #{tpu_custom_call.1} parent=11 // pred_check
          %p302 = pneg %p90
        $region18: #{tpu_custom_call.1} parent=11 // pred_check_branch
          %304 = sbr.rel (%p302) target = $region20
        $region19: #{tpu_custom_call.1} parent=11 // pred_region
          _
        $region20: #{tpu_custom_call.1} parent=11 // pred_fallthru
          _
        // Predicated region
        $region21: #{tpu_custom_call.1} parent=11 // pred_check
          %p305 = pneg %p111
        $region22: #{tpu_custom_call.1} parent=11 // pred_check_branch
          %307 = sbr.rel (%p305) target = $region24
        $region23: #{tpu_custom_call.1} parent=11 // pred_region
          %309 = vsyncadd [#allocation3], 0
          %s310 = sshll.u32 %s3, 4
          %s311 = int_to_ptr.hbm [resolvable:$true] %s310
          %s312 = sshll.u32 [#allocation2], 4
          %s313 = int_to_ptr.vmem [resolvable:$true] %s312
          %318 = dma.hbm_to_vmem [thread:$0]  %s311, 2048, %s313, [#allocation3], 64, 64, 4
        $region24: #{tpu_custom_call.1} parent=11 // pred_fallthru
          _
        // Predicated region
        $region25: #{tpu_custom_call.1} parent=11 // pred_check
          %p319 = pneg %p132
        $region26: #{tpu_custom_call.1} parent=11 // pred_check_branch
          %321 = sbr.rel (%p319) target = $region28
        $region27: #{tpu_custom_call.1} parent=11 // pred_region
          _
        $region28: #{tpu_custom_call.1} parent=11 // pred_fallthru
          _
        // Predicated region
        $region29: #{tpu_custom_call.1} parent=11 // pred_check
          %p322 = pneg %p153
        $region30: #{tpu_custom_call.1} parent=11 // pred_check_branch
          %324 = sbr.rel (%p322) target = $region32
        $region31: #{tpu_custom_call.1} parent=11 // pred_region
          _
        $region32: #{tpu_custom_call.1} parent=11 // pred_fallthru
          _
        // Predicated region
        $region33: #{tpu_custom_call.1} parent=11 // pred_check
          %p325 = pneg %p174
        $region34: #{tpu_custom_call.1} parent=11 // pred_check_branch
          %327 = sbr.rel (%p325) target = $region36
        $region35: #{tpu_custom_call.1} parent=11 // pred_region
          _
        $region36: #{tpu_custom_call.1} parent=11 // pred_fallthru
          _
        // Predicated region
        $region37: #{tpu_custom_call.1} parent=11 // pred_check
          %p328 = pneg %p195
        $region38: #{tpu_custom_call.1} parent=11 // pred_check_branch
          %330 = sbr.rel (%p328) target = $region40
        $region39: #{tpu_custom_call.1} parent=11 // pred_region
          %332 = vsyncadd [#allocation6], 0
          %s333 = sshll.u32 %s7, 4
          %s334 = int_to_ptr.hbm [resolvable:$true] %s333
          %s335 = sshll.u32 [#allocation5], 4
          %s336 = int_to_ptr.vmem [resolvable:$true] %s335
          %341 = dma.hbm_to_vmem [thread:$0]  %s334, 1024, %s336, [#allocation6], 64, 64, 4
        $region40: #{tpu_custom_call.1} parent=11 // pred_fallthru
          _
        // Predicated region
        $region41: #{tpu_custom_call.1} parent=11 // pred_check
          %p342 = pneg %p216
        $region42: #{tpu_custom_call.1} parent=11 // pred_check_branch
          %344 = sbr.rel (%p342) target = $region44
        $region43: #{tpu_custom_call.1} parent=11 // pred_region
          _
        $region44: #{tpu_custom_call.1} parent=11 // pred_fallthru
          _
        // Predicated region
        $region45: #{tpu_custom_call.1} parent=11 // pred_check
          %p345 = pneg %p237
        $region46: #{tpu_custom_call.1} parent=11 // pred_check_branch
          %347 = sbr.rel (%p345) target = $region48
        $region47: #{tpu_custom_call.1} parent=11 // pred_region
          _
        $region48: #{tpu_custom_call.1} parent=11 // pred_fallthru
          _
        // Predicated region
        $region49: #{tpu_custom_call.1} parent=11 // pred_check
          %p348 = pneg %p258
        $region50: #{tpu_custom_call.1} parent=11 // pred_check_branch
          %350 = sbr.rel (%p348) target = $region52
        $region51: #{tpu_custom_call.1} parent=11 // pred_region
          _
        $region52: #{tpu_custom_call.1} parent=11 // pred_fallthru
          _
      $region12: #{tpu_custom_call.1} parent=5 // pred_fallthru
        _
      %p351 = scmp.lt.s32.totalorder %s22, 2
      // Predicated region
      $region53: #{tpu_custom_call.1} parent=5 // pred_check
        %p352 = pneg %p351
      $region54: #{tpu_custom_call.1} parent=5 // pred_check_branch
        %354 = sbr.rel (%p352) target = $region56
      $region55: #{tpu_custom_call.1} parent=5 // pred_region
        // Predicated region
        $region57: #{tpu_custom_call.1} parent=55 // pred_check
          %p355 = pneg %p42
        $region58: #{tpu_custom_call.1} parent=55 // pred_check_branch
          %357 = sbr.rel (%p355) target = $region60
        $region59: #{tpu_custom_call.1} parent=55 // pred_region
          %s358 = smul.u32 2, %s22
          %p359 = scmp.lt.s32.totalorder %s358, 3
          %s360 = scalar_select %p359, %s358, 3
          %s361 = smul.addr %s360, 8
          %s362 = scalar_lea.vmem %s0, %s361
          %s363 = smul.u32 2, %s22
        $region60: #{tpu_custom_call.1} parent=55 // pred_fallthru
          _
      $region56: #{tpu_custom_call.1} parent=5 // pred_fallthru
        _
      %p364 = scmp.le.s32.totalorder 1, %s22
      %p365 = scmp.lt.s32.totalorder %s22, 3
      %p366 = pnand %p364, %p365
      %p367 = pneg %p366
      // Predicated region
      $region61: #{tpu_custom_call.1} parent=5 // pred_check
        _
      $region62: #{tpu_custom_call.1} parent=5 // pred_check_branch
        %369 = sbr.rel (%p366) target = $region64
      $region63: #{tpu_custom_call.1} parent=5 // pred_region
        %s370 = ssub.s32 %s22, 1
        // Predicated region
        $region65: #{tpu_custom_call.1} parent=63 // pred_check
          %p371 = pneg %p111
        $region66: #{tpu_custom_call.1} parent=63 // pred_check_branch
          %373 = sbr.rel (%p371) target = $region68
        $region67: #{tpu_custom_call.1} parent=63 // pred_region
          %375 = dma.done [#allocation3], 2048
        $region68: #{tpu_custom_call.1} parent=63 // pred_fallthru
          _
        // Predicated region
        $region69: #{tpu_custom_call.1} parent=63 // pred_check
          %p376 = pneg %p195
        $region70: #{tpu_custom_call.1} parent=63 // pred_check_branch
          %378 = sbr.rel (%p376) target = $region72
        $region71: #{tpu_custom_call.1} parent=63 // pred_region
          %380 = dma.done [#allocation6], 1024
        $region72: #{tpu_custom_call.1} parent=63 // pred_fallthru
          _
        %s381 = smul.u32 2, %s27
        %p382 = scmp.lt.s32.totalorder %s381, 3
        %s383 = scalar_select %p382, %s381, 3
        %s384 = smul.addr %s383, 8
        %s385 = scalar_lea.vmem %s0, %s384
        %p386 = pneg %p48
        %p387 = pneg %p45
        %p388 = pneg %p69
        %p389 = pneg %p66
        %p390 = pneg %p90
        %p391 = pneg %p87
        %p392 = pneg %p111
        %p393 = pneg %p108
        %p394 = pneg %p132
        %p395 = pneg %p129
        %p396 = pneg %p153
        %p397 = pneg %p150
        %p398 = pneg %p174
        %p399 = pneg %p171
        %p400 = pneg %p195
        %p401 = pneg %p192
        %p402 = pneg %p216
        %p403 = pneg %p213
        %p404 = pneg %p237
        %p405 = pneg %p234
        %p406 = pneg %p258
        %p407 = pneg %p255
        %p408 = pneg %p284
        %p409 = pneg %p281
        %s410 = sand.u32 %s271, 1
        %s411 = scalar_lea.sflag [#allocation4], %s410
        %s412 = sand.u32 %s271, 1
        %s413 = smul.addr %s412, 16
        %s414 = scalar_lea.vmem [#allocation7], %s413
        %s415 = smul.u32 2, %s27
        %p416 = scmp.lt.s32.totalorder %s415, 3
        %s417 = scalar_select %p416, %s415, 3
        %s418 = smul.addr %s417, 8
        %s419 = scalar_lea.vmem %s0, %s418
        %s420 = smul.u32 2, %s27
        %s421 = smul.u32 2, %s27
        %v423 = vld [vmem:[%s1] sm:$0xf]
        %v424 = vld [vmem:[%s1 + $0x4] sm:$0xf]
        %v425 = vld [vmem:[%s419] sm:$0xff]
        %v426 = vld [vmem:[%s419 + $0x8] sm:$0xff]
        %v427 = vpack.c.bf16 %v426, %v425
        %v428 = vld [vmem:[%s2] sm:$0x1]
        %v430 = vperm.slane %v428, 0
        %v434 = vunpack.c.l.b16 %v423
        %v435 = vunpack.c.l.b16 %v424
        %v436 = vpack.c.b16 %v435, %v434
        %vm438 = vcmask 130048
        %v440 = vsel %vm438, %v427, 0
        %442 = vmatpush.bf16.msra.mxu0 0
        %443 = vmatpush.bf16.msra.mxu0 0
        %444 = vmatpush.bf16.msra.mxu0 0
        %445 = vmatpush.bf16.msra.mxu0 0
        %446 = vmatpush.bf16.msra.mxu0 0
        %447 = vmatpush.bf16.msra.mxu0 0
        %448 = vmatpush.bf16.msra.mxu0 0
        %449 = vmatpush.bf16.msra.mxu0 %v436
        %450 = vmatmul.bf16.gmra.mxu0 %v440
        %v451 = vpop.f32.mrf.mxu0
        %v452 = vadd.f32 %v430, %v451
        %v453 = vpop.f32.mrf.mxu0
        %v454 = vadd.f32 %v430, %v453
        %455 = vdwg.mxu0
        %v456 = vmul.f32 %v452, 1.442695
        %v457 = vpow.pop %v456
        %v458 = vmul.f32 %v454, 1.442695
        %v459 = vpow.pop %v458
        %v460 = vadd.f32 %v457, 1.0
        %v461 = vadd.f32 %v459, 1.0
        %v462 = vmul.f32 %v460, %v460
        %v463 = vmul.f32 %v461, %v461
        %v464 = vadd.f32 %v462, 1.0
        %v465 = vadd.f32 %v463, 1.0
        %v466 = vrcp.pop %v464
        %v467 = vmul.f32 %v464, %v466
        %v468 = vsub.f32 1.0, %v467
        %v469 = vmul.f32 %v466, %v468
        %v470 = vadd.f32 %v466, %v469
        %vm471 = vweird.f32 %v464
        %vm472 = vweird.f32 %v466
        %vm473 = vmor %vm471, %vm472
        %v474 = vsel %vm473, %v466, %v470
        %v475 = vand.u32 2147483647, %v464
        %vm476 = vcmp.eq.f32.partialorder %v475, 8.507059e+37
        %v477 = vand.u32 %v464, 2147483648
        %v478 = vor.u32 1.1754944e-38, %v477
        %v479 = vsel %vm476, %v478, %v474
        %v480 = vrcp.pop %v465
        %v481 = vmul.f32 %v465, %v480
        %v482 = vsub.f32 1.0, %v481
        %v483 = vmul.f32 %v480, %v482
        %v484 = vadd.f32 %v480, %v483
        %vm485 = vweird.f32 %v465
        %vm486 = vweird.f32 %v480
        %vm487 = vmor %vm485, %vm486
        %v488 = vsel %vm487, %v480, %v484
        %v489 = vand.u32 2147483647, %v465
        %vm490 = vcmp.eq.f32.partialorder %v489, 8.507059e+37
        %v491 = vand.u32 %v465, 2147483648
        %v492 = vor.u32 1.1754944e-38, %v491
        %v493 = vsel %vm490, %v492, %v488
        %v494 = vmul.f32 %v479, 2.0
        %v495 = vmul.f32 %v493, 2.0
        %v496 = vsub.f32 1.0, %v494
        %v497 = vsub.f32 1.0, %v495
        %v498 = vmul.f32 %v452, %v496
        %v499 = vmul.f32 %v454, %v497
        %v500 = vld [vmem:[#allocation2] sm:$0xf]
        %v501 = vld [vmem:[#allocation2 + $0x4] sm:$0xf]
        %v502 = vld [vmem:[#allocation2 + $0x8] sm:$0xf]
        %v503 = vld [vmem:[#allocation2 + $0xc] sm:$0xf]
        %v504 = vld [vmem:[#allocation2 + $0x10] sm:$0xf]
        %v505 = vld [vmem:[#allocation2 + $0x14] sm:$0xf]
        %v506 = vld [vmem:[#allocation2 + $0x18] sm:$0xf]
        %v507 = vld [vmem:[#allocation2 + $0x1c] sm:$0xf]
        %v508 = vld [vmem:[#allocation2 + $0x20] sm:$0xf]
        %v509 = vld [vmem:[#allocation2 + $0x24] sm:$0xf]
        %v510 = vld [vmem:[#allocation2 + $0x28] sm:$0xf]
        %v511 = vld [vmem:[#allocation2 + $0x2c] sm:$0xf]
        %v512 = vld [vmem:[#allocation2 + $0x30] sm:$0xf]
        %v513 = vld [vmem:[#allocation2 + $0x34] sm:$0xf]
        %v514 = vld [vmem:[#allocation2 + $0x38] sm:$0xf]
        %v515 = vld [vmem:[#allocation2 + $0x3c] sm:$0xf]
        %v516 = vpack.c.bf16 %v499, %v498
        %v517 = vld [vmem:[%s4] sm:$0x1]
        %v519 = vperm.slane %v517, 0
        %v537 = vunpack.c.l.b16 %v500
        %v538 = vunpack.c.l.b16 %v501
        %v539 = vunpack.c.l.b16 %v502
        %v540 = vunpack.c.l.b16 %v503
        %v541 = vunpack.c.l.b16 %v504
        %v542 = vunpack.c.l.b16 %v505
        %v543 = vunpack.c.l.b16 %v506
        %v544 = vunpack.c.l.b16 %v507
        %v545 = vunpack.c.l.b16 %v508
        %v546 = vunpack.c.l.b16 %v509
        %v547 = vunpack.c.l.b16 %v510
        %v548 = vunpack.c.l.b16 %v511
        %v549 = vunpack.c.l.b16 %v512
        %v550 = vunpack.c.l.b16 %v513
        %v551 = vunpack.c.l.b16 %v514
        %v552 = vunpack.c.l.b16 %v515
        %v553 = vpack.c.b16 %v538, %v537
        %v554 = vpack.c.b16 %v540, %v539
        %v555 = vpack.c.b16 %v542, %v541
        %v556 = vpack.c.b16 %v544, %v543
        %v557 = vpack.c.b16 %v546, %v545
        %v558 = vpack.c.b16 %v548, %v547
        %v559 = vpack.c.b16 %v550, %v549
        %v560 = vpack.c.b16 %v552, %v551
        %569 = vmatpush.bf16.msra.mxu0 %v560
        %570 = vmatpush.bf16.msra.mxu0 %v559
        %571 = vmatpush.bf16.msra.mxu0 %v558
        %572 = vmatpush.bf16.msra.mxu0 %v557
        %573 = vmatpush.bf16.msra.mxu0 %v556
        %574 = vmatpush.bf16.msra.mxu0 %v555
        %575 = vmatpush.bf16.msra.mxu0 %v554
        %576 = vmatpush.bf16.msra.mxu0 %v553
        %577 = vmatmul.bf16.gmra.mxu0 %v516
        %v578 = vpop.f32.mrf.mxu0
        %v579 = vadd.f32 %v519, %v578
        %v580 = vpop.f32.mrf.mxu0
        %v581 = vadd.f32 %v519, %v580
        %582 = vdwg.mxu0
        %v583 = vld [vmem:[%s5] sm:$0x1]
        %v584 = vld [vmem:[%s6] sm:$0x1]
        %585 = vadd.xlane.f32.xlu0 %v579
        %v586 = vpop.xlane.xlu0 %585
        %587 = vadd.xlane.f32.xlu0 %v581
        %v588 = vpop.xlane.xlu0 %587
        %v589 = vrcp.pop 128.0
        %v590 = vmul.f32 128.0, %v589
        %v591 = vsub.f32 1.0, %v590
        %v592 = vmul.f32 %v589, %v591
        %v593 = vadd.f32 %v589, %v592
        %vm594 = vweird.f32 %v589
        %v595 = vsel %vm594, %v589, %v593
        %v596 = vmul.f32 %v586, %v595
        %v597 = vmul.f32 %v588, %v595
        %v598 = vsub.f32 %v579, %v596
        %v599 = vsub.f32 %v581, %v597
        %v600 = vmul.f32 %v598, %v598
        %v601 = vmul.f32 %v599, %v599
        %602 = vadd.xlane.f32.xlu0 %v600
        %v603 = vpop.xlane.xlu0 %602
        %604 = vadd.xlane.f32.xlu0 %v601
        %v605 = vpop.xlane.xlu0 %604
        %v606 = vmul.f32 %v603, %v595
        %v607 = vmul.f32 %v605, %v595
        %v608 = vadd.f32 %v606, 1e-05
        %v609 = vadd.f32 %v607, 1e-05
        %v610 = vrsqrt.pop %v608
        %v611 = vmul.f32 %v610, %v608
        %v612 = vmul.f32 %v611, %v610
        %v613 = vmul.f32 0.5, %v612
        %v614 = vsub.f32 1.5, %v613
        %v615 = vmul.f32 %v610, %v614
        %vm616 = vweird.f32 %v608
        %vm617 = vweird.f32 %v610
        %vm618 = vmor %vm616, %vm617
        %v619 = vsel %vm618, %v610, %v615
        %v620 = vrsqrt.pop %v609
        %v621 = vmul.f32 %v620, %v609
        %v622 = vmul.f32 %v621, %v620
        %v623 = vmul.f32 0.5, %v622
        %v624 = vsub.f32 1.5, %v623
        %v625 = vmul.f32 %v620, %v624
        %vm626 = vweird.f32 %v609
        %vm627 = vweird.f32 %v620
        %vm628 = vmor %vm626, %vm627
        %v629 = vsel %vm628, %v620, %v625
        %v630 = vmul.f32 %v598, %v619
        %v631 = vmul.f32 %v599, %v629
        %v633 = vperm.slane %v583, 0
        %v635 = vmul.f32 %v630, %v633
        %v636 = vmul.f32 %v631, %v633
        %v638 = vperm.slane %v584, 0
        %v640 = vadd.f32 %v635, %v638
        %v641 = vadd.f32 %v636, %v638
        %v642 = vmul.f32 %v640, 1.442695
        %v643 = vpow.pop %v642
        %v644 = vmul.f32 %v641, 1.442695
        %v645 = vpow.pop %v644
        %v646 = vadd.f32 %v643, 1.0
        %v647 = vadd.f32 %v645, 1.0
        %v648 = vmul.f32 %v646, %v646
        %v649 = vmul.f32 %v647, %v647
        %v650 = vadd.f32 %v648, 1.0
        %v651 = vadd.f32 %v649, 1.0
        %v652 = vrcp.pop %v650
        %v653 = vmul.f32 %v650, %v652
        %v654 = vsub.f32 1.0, %v653
        %v655 = vmul.f32 %v652, %v654
        %v656 = vadd.f32 %v652, %v655
        %vm657 = vweird.f32 %v650
        %vm658 = vweird.f32 %v652
        %vm659 = vmor %vm657, %vm658
        %v660 = vsel %vm659, %v652, %v656
        %v661 = vand.u32 2147483647, %v650
        %vm662 = vcmp.eq.f32.partialorder %v661, 8.507059e+37
        %v663 = vand.u32 %v650, 2147483648
        %v664 = vor.u32 1.1754944e-38, %v663
        %v665 = vsel %vm662, %v664, %v660
        %v666 = vrcp.pop %v651
        %v667 = vmul.f32 %v651, %v666
        %v668 = vsub.f32 1.0, %v667
        %v669 = vmul.f32 %v666, %v668
        %v670 = vadd.f32 %v666, %v669
        %vm671 = vweird.f32 %v651
        %vm672 = vweird.f32 %v666
        %vm673 = vmor %vm671, %vm672
        %v674 = vsel %vm673, %v666, %v670
        %v675 = vand.u32 2147483647, %v651
        %vm676 = vcmp.eq.f32.partialorder %v675, 8.507059e+37
        %v677 = vand.u32 %v651, 2147483648
        %v678 = vor.u32 1.1754944e-38, %v677
        %v679 = vsel %vm676, %v678, %v674
        %v680 = vmul.f32 %v665, 2.0
        %v681 = vmul.f32 %v679, 2.0
        %v682 = vsub.f32 1.0, %v680
        %v683 = vsub.f32 1.0, %v681
        %v684 = vmul.f32 %v640, %v682
        %v685 = vmul.f32 %v641, %v683
        %s686 = scalar_lea.vmem [#allocation2], 64
        %v687 = vld [vmem:[%s686] sm:$0xf]
        %v688 = vld [vmem:[%s686 + $0x4] sm:$0xf]
        %v689 = vld [vmem:[%s686 + $0x8] sm:$0xf]
        %v690 = vld [vmem:[%s686 + $0xc] sm:$0xf]
        %v691 = vld [vmem:[%s686 + $0x10] sm:$0xf]
        %v692 = vld [vmem:[%s686 + $0x14] sm:$0xf]
        %v693 = vld [vmem:[%s686 + $0x18] sm:$0xf]
        %v694 = vld [vmem:[%s686 + $0x1c] sm:$0xf]
        %v695 = vld [vmem:[%s686 + $0x20] sm:$0xf]
        %v696 = vld [vmem:[%s686 + $0x24] sm:$0xf]
        %v697 = vld [vmem:[%s686 + $0x28] sm:$0xf]
        %v698 = vld [vmem:[%s686 + $0x2c] sm:$0xf]
        %v699 = vld [vmem:[%s686 + $0x30] sm:$0xf]
        %v700 = vld [vmem:[%s686 + $0x34] sm:$0xf]
        %v701 = vld [vmem:[%s686 + $0x38] sm:$0xf]
        %v702 = vld [vmem:[%s686 + $0x3c] sm:$0xf]
        %v703 = vpack.c.bf16 %v685, %v684
        %s704 = scalar_lea.vmem %s4, 1
        %v705 = vld [vmem:[%s704] sm:$0x1]
        %v707 = vperm.slane %v705, 0
        %v725 = vunpack.c.l.b16 %v687
        %v726 = vunpack.c.l.b16 %v688
        %v727 = vunpack.c.l.b16 %v689
        %v728 = vunpack.c.l.b16 %v690
        %v729 = vunpack.c.l.b16 %v691
        %v730 = vunpack.c.l.b16 %v692
        %v731 = vunpack.c.l.b16 %v693
        %v732 = vunpack.c.l.b16 %v694
        %v733 = vunpack.c.l.b16 %v695
        %v734 = vunpack.c.l.b16 %v696
        %v735 = vunpack.c.l.b16 %v697
        %v736 = vunpack.c.l.b16 %v698
        %v737 = vunpack.c.l.b16 %v699
        %v738 = vunpack.c.l.b16 %v700
        %v739 = vunpack.c.l.b16 %v701
        %v740 = vunpack.c.l.b16 %v702
        %v741 = vpack.c.b16 %v726, %v725
        %v742 = vpack.c.b16 %v728, %v727
        %v743 = vpack.c.b16 %v730, %v729
        %v744 = vpack.c.b16 %v732, %v731
        %v745 = vpack.c.b16 %v734, %v733
        %v746 = vpack.c.b16 %v736, %v735
        %v747 = vpack.c.b16 %v738, %v737
        %v748 = vpack.c.b16 %v740, %v739
        %757 = vmatpush.bf16.msra.mxu0 %v748
        %758 = vmatpush.bf16.msra.mxu0 %v747
        %759 = vmatpush.bf16.msra.mxu0 %v746
        %760 = vmatpush.bf16.msra.mxu0 %v745
        %761 = vmatpush.bf16.msra.mxu0 %v744
        %762 = vmatpush.bf16.msra.mxu0 %v743
        %763 = vmatpush.bf16.msra.mxu0 %v742
        %764 = vmatpush.bf16.msra.mxu0 %v741
        %765 = vmatmul.bf16.gmra.mxu0 %v703
        %v766 = vpop.f32.mrf.mxu0
        %v767 = vadd.f32 %v707, %v766
        %v768 = vpop.f32.mrf.mxu0
        %v769 = vadd.f32 %v707, %v768
        %770 = vdwg.mxu0
        %s771 = scalar_lea.vmem %s5, 1
        %v772 = vld [vmem:[%s771] sm:$0x1]
        %s773 = scalar_lea.vmem %s6, 1
        %v774 = vld [vmem:[%s773] sm:$0x1]
        %775 = vadd.xlane.f32.xlu0 %v767
        %v776 = vpop.xlane.xlu0 %775
        %777 = vadd.xlane.f32.xlu0 %v769
        %v778 = vpop.xlane.xlu0 %777
        %v779 = vmul.f32 %v776, %v595
        %v780 = vmul.f32 %v778, %v595
        %v781 = vsub.f32 %v767, %v779
        %v782 = vsub.f32 %v769, %v780
        %v783 = vmul.f32 %v781, %v781
        %v784 = vmul.f32 %v782, %v782
        %785 = vadd.xlane.f32.xlu0 %v783
        %v786 = vpop.xlane.xlu0 %785
        %787 = vadd.xlane.f32.xlu0 %v784
        %v788 = vpop.xlane.xlu0 %787
        %v789 = vmul.f32 %v786, %v595
        %v790 = vmul.f32 %v788, %v595
        %v791 = vadd.f32 %v789, 1e-05
        %v792 = vadd.f32 %v790, 1e-05
        %v793 = vrsqrt.pop %v791
        %v794 = vmul.f32 %v793, %v791
        %v795 = vmul.f32 %v794, %v793
        %v796 = vmul.f32 0.5, %v795
        %v797 = vsub.f32 1.5, %v796
        %v798 = vmul.f32 %v793, %v797
        %vm799 = vweird.f32 %v791
        %vm800 = vweird.f32 %v793
        %vm801 = vmor %vm799, %vm800
        %v802 = vsel %vm801, %v793, %v798
        %v803 = vrsqrt.pop %v792
        %v804 = vmul.f32 %v803, %v792
        %v805 = vmul.f32 %v804, %v803
        %v806 = vmul.f32 0.5, %v805
        %v807 = vsub.f32 1.5, %v806
        %v808 = vmul.f32 %v803, %v807
        %vm809 = vweird.f32 %v792
        %vm810 = vweird.f32 %v803
        %vm811 = vmor %vm809, %vm810
        %v812 = vsel %vm811, %v803, %v808
        %v813 = vmul.f32 %v781, %v802
        %v814 = vmul.f32 %v782, %v812
        %v816 = vperm.slane %v772, 0
        %v818 = vmul.f32 %v813, %v816
        %v819 = vmul.f32 %v814, %v816
        %v821 = vperm.slane %v774, 0
        %v823 = vadd.f32 %v818, %v821
        %v824 = vadd.f32 %v819, %v821
        %v825 = vmul.f32 %v823, 1.442695
        %v826 = vpow.pop %v825
        %v827 = vmul.f32 %v824, 1.442695
        %v828 = vpow.pop %v827
        %v829 = vadd.f32 %v826, 1.0
        %v830 = vadd.f32 %v828, 1.0
        %v831 = vmul.f32 %v829, %v829
        %v832 = vmul.f32 %v830, %v830
        %v833 = vadd.f32 %v831, 1.0
        %v834 = vadd.f32 %v832, 1.0
        %v835 = vrcp.pop %v833
        %v836 = vmul.f32 %v833, %v835
        %v837 = vsub.f32 1.0, %v836
        %v838 = vmul.f32 %v835, %v837
        %v839 = vadd.f32 %v835, %v838
        %vm840 = vweird.f32 %v833
        %vm841 = vweird.f32 %v835
        %vm842 = vmor %vm840, %vm841
        %v843 = vsel %vm842, %v835, %v839
        %v844 = vand.u32 2147483647, %v833
        %vm845 = vcmp.eq.f32.partialorder %v844, 8.507059e+37
        %v846 = vand.u32 %v833, 2147483648
        %v847 = vor.u32 1.1754944e-38, %v846
        %v848 = vsel %vm845, %v847, %v843
        %v849 = vrcp.pop %v834
        %v850 = vmul.f32 %v834, %v849
        %v851 = vsub.f32 1.0, %v850
        %v852 = vmul.f32 %v849, %v851
        %v853 = vadd.f32 %v849, %v852
        %vm854 = vweird.f32 %v834
        %vm855 = vweird.f32 %v849
        %vm856 = vmor %vm854, %vm855
        %v857 = vsel %vm856, %v849, %v853
        %v858 = vand.u32 2147483647, %v834
        %vm859 = vcmp.eq.f32.partialorder %v858, 8.507059e+37
        %v860 = vand.u32 %v834, 2147483648
        %v861 = vor.u32 1.1754944e-38, %v860
        %v862 = vsel %vm859, %v861, %v857
        %v863 = vmul.f32 %v848, 2.0
        %v864 = vmul.f32 %v862, 2.0
        %v865 = vsub.f32 1.0, %v863
        %v866 = vsub.f32 1.0, %v864
        %v867 = vmul.f32 %v823, %v865
        %v868 = vmul.f32 %v824, %v866
        %v869 = vld [vmem:[#allocation5] sm:$0xf]
        %v870 = vld [vmem:[#allocation5 + $0x4] sm:$0xf]
        %v871 = vld [vmem:[#allocation5 + $0x8] sm:$0xf]
        %v872 = vld [vmem:[#allocation5 + $0xc] sm:$0xf]
        %v873 = vld [vmem:[#allocation5 + $0x10] sm:$0xf]
        %v874 = vld [vmem:[#allocation5 + $0x14] sm:$0xf]
        %v875 = vld [vmem:[#allocation5 + $0x18] sm:$0xf]
        %v876 = vld [vmem:[#allocation5 + $0x1c] sm:$0xf]
        %v877 = vld [vmem:[#allocation5 + $0x20] sm:$0xf]
        %v878 = vld [vmem:[#allocation5 + $0x24] sm:$0xf]
        %v879 = vld [vmem:[#allocation5 + $0x28] sm:$0xf]
        %v880 = vld [vmem:[#allocation5 + $0x2c] sm:$0xf]
        %v881 = vld [vmem:[#allocation5 + $0x30] sm:$0xf]
        %v882 = vld [vmem:[#allocation5 + $0x34] sm:$0xf]
        %v883 = vld [vmem:[#allocation5 + $0x38] sm:$0xf]
        %v884 = vld [vmem:[#allocation5 + $0x3c] sm:$0xf]
        %v885 = vpack.c.bf16 %v868, %v867
        %v886 = vld [vmem:[%s8] sm:$0x1]
        %v888 = vperm.slane %v886, 0
        %v906 = vunpack.c.l.b16 %v869
        %v907 = vunpack.c.l.b16 %v870
        %v908 = vunpack.c.l.b16 %v871
        %v909 = vunpack.c.l.b16 %v872
        %v910 = vunpack.c.l.b16 %v873
        %v911 = vunpack.c.l.b16 %v874
        %v912 = vunpack.c.l.b16 %v875
        %v913 = vunpack.c.l.b16 %v876
        %v914 = vunpack.c.l.b16 %v877
        %v915 = vunpack.c.l.b16 %v878
        %v916 = vunpack.c.l.b16 %v879
        %v917 = vunpack.c.l.b16 %v880
        %v918 = vunpack.c.l.b16 %v881
        %v919 = vunpack.c.l.b16 %v882
        %v920 = vunpack.c.l.b16 %v883
        %v921 = vunpack.c.l.b16 %v884
        %v922 = vpack.c.b16 %v907, %v906
        %v923 = vpack.c.b16 %v909, %v908
        %v924 = vpack.c.b16 %v911, %v910
        %v925 = vpack.c.b16 %v913, %v912
        %v926 = vpack.c.b16 %v915, %v914
        %v927 = vpack.c.b16 %v917, %v916
        %v928 = vpack.c.b16 %v919, %v918
        %v929 = vpack.c.b16 %v921, %v920
        %938 = vmatpush.bf16.msra.mxu0 %v929
        %939 = vmatpush.bf16.msra.mxu0 %v928
        %940 = vmatpush.bf16.msra.mxu0 %v927
        %941 = vmatpush.bf16.msra.mxu0 %v926
        %942 = vmatpush.bf16.msra.mxu0 %v925
        %943 = vmatpush.bf16.msra.mxu0 %v924
        %944 = vmatpush.bf16.msra.mxu0 %v923
        %945 = vmatpush.bf16.msra.mxu0 %v922
        %946 = vmatmul.bf16.gmra.mxu0 %v885
        %v947 = vpop.f32.mrf.mxu0
        %v948 = vadd.f32 %v888, %v947
        %v949 = vpop.f32.mrf.mxu0
        %v950 = vadd.f32 %v888, %v949
        %951 = vdwg.mxu0
        %v952 = vld [vmem:[%s9] sm:$0x1]
        %v954 = vperm.slane %v952, 0
        %v956 = vmax.f32 %v948, %v954
        %v957 = vmax.f32 %v950, %v954
        %v958 = vld [vmem:[%s10] sm:$0x1]
        %v960 = vperm.slane %v958, 0
        %v962 = vmin.f32 %v956, %v960
        %v963 = vmin.f32 %v957, %v960
        %964 = vst [vmem:[%s414] sm:$0xff] %v962
        %965 = vst [vmem:[%s414 + $0x8] sm:$0xff] %v963
        %s966 = sand.u32 %s271, 1
        %s967 = scalar_lea.sflag [#allocation4], %s966
        %s968 = sand.u32 %s271, 1
        %s969 = smul.addr %s968, 16
        %s970 = scalar_lea.vmem [#allocation7], %s969
        // Predicated region
        $region73: #{tpu_custom_call.1} parent=63 // pred_check
          %p971 = pneg %p281
        $region74: #{tpu_custom_call.1} parent=63 // pred_check_branch
          %973 = sbr.rel (%p971) target = $region76
        $region75: #{tpu_custom_call.1} parent=63 // pred_region
          %s974 = smul.u32 2, %s27
          %976 = vsyncadd %s967, 0
          %s977 = smul.addr %s974, 8
          %s978 = scalar_lea.hbm %s11, %s977
          %s979 = sshll.u32 %s970, 4
          %s980 = int_to_ptr.vmem [resolvable:$true] %s979
          %s981 = sshll.u32 %s978, 4
          %s982 = int_to_ptr.hbm [resolvable:$true] %s981
          %987 = dma.vmem_to_hbm [thread:$0]  %s980, 256, %s982, %s967, 128, 128, 8
        $region76: #{tpu_custom_call.1} parent=63 // pred_fallthru
          _
      $region64: #{tpu_custom_call.1} parent=5 // pred_fallthru
        _
      %p988 = scmp.le.s32.totalorder 2, %s22
      // Predicated region
      $region77: #{tpu_custom_call.1} parent=5 // pred_check
        %p989 = pneg %p988
      $region78: #{tpu_custom_call.1} parent=5 // pred_check_branch
        %991 = sbr.rel (%p989) target = $region80
      $region79: #{tpu_custom_call.1} parent=5 // pred_region
        %s992 = ssub.s32 %s22, 2
        // Predicated region
        $region81: #{tpu_custom_call.1} parent=79 // pred_check
          %p993 = pneg %p287
        $region82: #{tpu_custom_call.1} parent=79 // pred_check_branch
          %995 = sbr.rel (%p993) target = $region84
        $region83: #{tpu_custom_call.1} parent=79 // pred_region
          %s996 = sand.u32 %s272, 1
          %s997 = scalar_lea.sflag [#allocation4], %s996
          %s998 = sand.u32 %s272, 1
          %s999 = smul.addr %s998, 16
          %s1000 = scalar_lea.vmem [#allocation7], %s999
          %1002 = dma.done %s997, 256
        $region84: #{tpu_custom_call.1} parent=79 // pred_fallthru
          _
      $region80: #{tpu_custom_call.1} parent=5 // pred_fallthru
        _
    $region6: #{tpu_custom_call.1} parent=1 // loop_footer
      %s26 = sadd.s32 1, %s22
    $region7: #{tpu_custom_call.1} parent=1 // loop_footer_branch
      %21 = sbr.rel target = $region3
    $region8: #{tpu_custom_call.1} parent=1 // loop_exit
      _
    %1003 = vsyncpa [#allocation3], 1
    %s1004 = scalar_lea.sflag [#allocation3], 1
    %1005 = vsyncpa %s1004, 1
    %1006 = vsyncpa [#allocation6], 1
    %1007 = vsyncpa [#allocation4], 1
    %s1008 = scalar_lea.sflag [#allocation4], 1
    %1009 = vsyncpa %s1008, 1

// kernel: tpu_custom_call.1
$region0: #{tpu_custom_call.1}
  #allocation0 [shape = 'u32[]', space=smem, size = 0x4, offset = 0x4, fixed_abs, tag = 'smem constant byte address 0x4 - core index']
  #allocation1 [shape = 'u32[72,128]{1,0:T(1,128)}', space=vmem, size = 0x9000, scoped, tag = 'internal scratch']
  %s0 = inlined_call_operand.vmem [shape: f32[32,16], index: 0, kind: input, shape index: {}]
  %s1 = inlined_call_operand.vmem [shape: bf16[16,128], index: 1, kind: input, shape index: {}]
  %s2 = inlined_call_operand.vmem [shape: f32[1,128], index: 2, kind: input, shape index: {}]
  %s3 = inlined_call_operand.hbm [shape: bf16[2,128,128], index: 3, kind: input, shape index: {}]
  %s4 = inlined_call_operand.vmem [shape: f32[2,1,128], index: 4, kind: input, shape index: {}]
  %s5 = inlined_call_operand.vmem [shape: f32[2,1,128], index: 5, kind: input, shape index: {}]
  %s6 = inlined_call_operand.vmem [shape: f32[2,1,128], index: 6, kind: input, shape index: {}]
  %s7 = inlined_call_operand.hbm [shape: bf16[128,128], index: 7, kind: input, shape index: {}]
  %s8 = inlined_call_operand.vmem [shape: f32[1,128], index: 8, kind: input, shape index: {}]
  %s9 = inlined_call_operand.vmem [shape: f32[1,128], index: 9, kind: input, shape index: {}]
  %s10 = inlined_call_operand.vmem [shape: f32[1,128], index: 10, kind: input, shape index: {}]
  %s11 = inlined_call_operand.hbm [shape: f32[32,128], index: 11, kind: output, shape index: {}]
  %s12 = sld [smem:[#allocation0]]
  $region85: #{tpu_custom_call.1} parent=0
    _
  %s14 = ssub.s32 1, %s12
  %s15 = scalar_select 0, %s14, %s12
  $region1: #{tpu_custom_call.1} parent=0
    #allocation2 [shape = 'u8[65536]{0}', space=vmem, size = 0x10000, scoped, tag = 'input window, operand 3, single buffered']
    #allocation3 [shape = 's32[2]{0}', space=sflag, size = 0x8, scoped, tag = 'scoped memory for tpu_custom_call.1']
    #allocation4 [shape = 's32[2]{0}', space=sflag, size = 0x8, scoped, tag = 'scoped memory for tpu_custom_call.1']
    #allocation5 [shape = 'u8[32768]{0}', space=vmem, size = 0x8000, scoped, tag = 'input window, operand 7, single buffered']
    #allocation6 [shape = 's32[1]{0}', space=sflag, size = 0x4, scoped, tag = 'scoped memory for tpu_custom_call.1']
    #allocation7 [shape = 'u8[16384]{0}', space=vmem, size = 0x4000, scoped, tag = 'output window, operand 0']
    %16 = vsyncpa [#allocation3], 0
    %17 = vsyncpa [#allocation6], 0
    %18 = vsyncpa [#allocation4], 0
    %s19 = scalar_lea.sflag [#allocation4], 1
    %20 = vsyncpa %s19, 0
    loop: start=0, step=1, limit=4
    $region2: #{tpu_custom_call.1} parent=1 // loop_pre_header
      _
    $region3: #{tpu_custom_call.1} parent=1 // loop_header
      %s22 = sphi 0, %s26
      %p23 = scmp.ge.s32.totalorder %s22, 4
      %s32 = sphi 0, %s34
      %s35 = sphi 0, %s32
      %s36 = sphi 0, %s35
      %s52 = sphi 0, %s36
      %s56 = sphi 0, %s56
      %s58 = sphi 0, %s56
      %s59 = sphi 0, %s58
      %s73 = sphi 0, %s59
      %s77 = sphi 0, %s77
      %s79 = sphi 0, %s77
      %s80 = sphi 0, %s79
      %s94 = sphi 0, %s80
      %s98 = sphi 0, %s98
      %s100 = sphi 0, %s98
      %s101 = sphi 0, %s100
      %s115 = sphi 0, %s101
      %s119 = sphi 0, %s119
      %s121 = sphi 0, %s119
      %s122 = sphi 0, %s121
      %s136 = sphi 0, %s122
      %s140 = sphi 0, %s140
      %s142 = sphi 0, %s140
      %s143 = sphi 0, %s142
      %s157 = sphi 0, %s143
      %s161 = sphi 0, %s161
      %s163 = sphi 0, %s161
      %s164 = sphi 0, %s163
      %s178 = sphi 0, %s164
      %s182 = sphi 0, %s182
      %s184 = sphi 0, %s182
      %s185 = sphi 0, %s184
      %s199 = sphi 0, %s185
      %s203 = sphi 0, %s203
      %s205 = sphi 0, %s203
      %s206 = sphi 0, %s205
      %s220 = sphi 0, %s206
      %s224 = sphi 0, %s224
      %s226 = sphi 0, %s224
      %s227 = sphi 0, %s226
      %s241 = sphi 0, %s227
      %s245 = sphi 0, %s245
      %s247 = sphi 0, %s245
      %s248 = sphi 0, %s247
      %s262 = sphi 0, %s248
      %s268 = sphi 0, %s270
      %s271 = sphi 0, %s268
      %s272 = sphi 0, %s271
      %s288 = sphi 0, %s272
    $region4: #{tpu_custom_call.1} parent=1 // loop_header_branch
      %25 = sbr.rel (%p23) target = $region8
    $region5: #{tpu_custom_call.1} parent=1 // loop_body
      %s27 = ssub.s32 %s22, 1
      %s28 = ssub.s32 %s22, 2
      %s29 = sadd.s32 %s22, 1
      %s30 = ssub.s32 %s22, %s29
      %p31 = scmp.eq.s32.totalorder %s30, 0
      %s33 = sadd.s32 %s32, 1
      %s34 = scalar_select %p31, %s32, %s33
      %p37 = pneg %p31
      %p38 = scmp.eq.s32.totalorder %s22, 1
      %p39 = por %p37, %p38
      %p40 = scmp.ne.s32.totalorder %s32, %s35
      %p41 = scmp.eq.s32.totalorder %s22, 0
      %p42 = por %p40, %p41
      %p43 = scmp.ne.s32.totalorder %s32, %s35
      %p44 = scmp.eq.s32.totalorder %s27, 1
      %p45 = por %p43, %p44
      %p46 = scmp.ne.s32.totalorder %s35, %s36
      %p47 = scmp.eq.s32.totalorder %s27, 0
      %p48 = por %p46, %p47
      %p49 = scmp.ne.s32.totalorder %s35, %s36
      %p50 = scmp.eq.s32.totalorder %s28, 1
      %p51 = por %p49, %p50
      %p53 = scmp.ne.s32.totalorder %s36, %s52
      %p54 = scmp.eq.s32.totalorder %s28, 0
      %p55 = por %p53, %p54
      %s57 = sadd.s32 %s56, 1
      %p60 = scmp.eq.s32.totalorder %s22, 1
      %p61 = scmp.ne.s32.totalorder %s56, %s58
      %p62 = scmp.eq.s32.totalorder %s22, 0
      %p63 = por %p61, %p62
      %p64 = scmp.ne.s32.totalorder %s56, %s58
      %p65 = scmp.eq.s32.totalorder %s27, 1
      %p66 = por %p64, %p65
      %p67 = scmp.ne.s32.totalorder %s58, %s59
      %p68 = scmp.eq.s32.totalorder %s27, 0
      %p69 = por %p67, %p68
      %p70 = scmp.ne.s32.totalorder %s58, %s59
      %p71 = scmp.eq.s32.totalorder %s28, 1
      %p72 = por %p70, %p71
      %p74 = scmp.ne.s32.totalorder %s59, %s73
      %p75 = scmp.eq.s32.totalorder %s28, 0
      %p76 = por %p74, %p75
      %s78 = sadd.s32 %s77, 1
      %p81 = scmp.eq.s32.totalorder %s22, 1
      %p82 = scmp.ne.s32.totalorder %s77, %s79
      %p83 = scmp.eq.s32.totalorder %s22, 0
      %p84 = por %p82, %p83
      %p85 = scmp.ne.s32.totalorder %s77, %s79
      %p86 = scmp.eq.s32.totalorder %s27, 1
      %p87 = por %p85, %p86
      %p88 = scmp.ne.s32.totalorder %s79, %s80
      %p89 = scmp.eq.s32.totalorder %s27, 0
      %p90 = por %p88, %p89
      %p91 = scmp.ne.s32.totalorder %s79, %s80
      %p92 = scmp.eq.s32.totalorder %s28, 1
      %p93 = por %p91, %p92
      %p95 = scmp.ne.s32.totalorder %s80, %s94
      %p96 = scmp.eq.s32.totalorder %s28, 0
      %p97 = por %p95, %p96
      %s99 = sadd.s32 %s98, 1
      %p102 = scmp.eq.s32.totalorder %s22, 1
      %p103 = scmp.ne.s32.totalorder %s98, %s100
      %p104 = scmp.eq.s32.totalorder %s22, 0
      %p105 = por %p103, %p104
      %p106 = scmp.ne.s32.totalorder %s98, %s100
      %p107 = scmp.eq.s32.totalorder %s27, 1
      %p108 = por %p106, %p107
      %p109 = scmp.ne.s32.totalorder %s100, %s101
      %p110 = scmp.eq.s32.totalorder %s27, 0
      %p111 = por %p109, %p110
      %p112 = scmp.ne.s32.totalorder %s100, %s101
      %p113 = scmp.eq.s32.totalorder %s28, 1
      %p114 = por %p112, %p113
      %p116 = scmp.ne.s32.totalorder %s101, %s115
      %p117 = scmp.eq.s32.totalorder %s28, 0
      %p118 = por %p116, %p117
      %s120 = sadd.s32 %s119, 1
      %p123 = scmp.eq.s32.totalorder %s22, 1
      %p124 = scmp.ne.s32.totalorder %s119, %s121
      %p125 = scmp.eq.s32.totalorder %s22, 0
      %p126 = por %p124, %p125
      %p127 = scmp.ne.s32.totalorder %s119, %s121
      %p128 = scmp.eq.s32.totalorder %s27, 1
      %p129 = por %p127, %p128
      %p130 = scmp.ne.s32.totalorder %s121, %s122
      %p131 = scmp.eq.s32.totalorder %s27, 0
      %p132 = por %p130, %p131
      %p133 = scmp.ne.s32.totalorder %s121, %s122
      %p134 = scmp.eq.s32.totalorder %s28, 1
      %p135 = por %p133, %p134
      %p137 = scmp.ne.s32.totalorder %s122, %s136
      %p138 = scmp.eq.s32.totalorder %s28, 0
      %p139 = por %p137, %p138
      %s141 = sadd.s32 %s140, 1
      %p144 = scmp.eq.s32.totalorder %s22, 1
      %p145 = scmp.ne.s32.totalorder %s140, %s142
      %p146 = scmp.eq.s32.totalorder %s22, 0
      %p147 = por %p145, %p146
      %p148 = scmp.ne.s32.totalorder %s140, %s142
      %p149 = scmp.eq.s32.totalorder %s27, 1
      %p150 = por %p148, %p149
      %p151 = scmp.ne.s32.totalorder %s142, %s143
      %p152 = scmp.eq.s32.totalorder %s27, 0
      %p153 = por %p151, %p152
      %p154 = scmp.ne.s32.totalorder %s142, %s143
      %p155 = scmp.eq.s32.totalorder %s28, 1
      %p156 = por %p154, %p155
      %p158 = scmp.ne.s32.totalorder %s143, %s157
      %p159 = scmp.eq.s32.totalorder %s28, 0
      %p160 = por %p158, %p159
      %s162 = sadd.s32 %s161, 1
      %p165 = scmp.eq.s32.totalorder %s22, 1
      %p166 = scmp.ne.s32.totalorder %s161, %s163
      %p167 = scmp.eq.s32.totalorder %s22, 0
      %p168 = por %p166, %p167
      %p169 = scmp.ne.s32.totalorder %s161, %s163
      %p170 = scmp.eq.s32.totalorder %s27, 1
      %p171 = por %p169, %p170
      %p172 = scmp.ne.s32.totalorder %s163, %s164
      %p173 = scmp.eq.s32.totalorder %s27, 0
      %p174 = por %p172, %p173
      %p175 = scmp.ne.s32.totalorder %s163, %s164
      %p176 = scmp.eq.s32.totalorder %s28, 1
      %p177 = por %p175, %p176
      %p179 = scmp.ne.s32.totalorder %s164, %s178
      %p180 = scmp.eq.s32.totalorder %s28, 0
      %p181 = por %p179, %p180
      %s183 = sadd.s32 %s182, 1
      %p186 = scmp.eq.s32.totalorder %s22, 1
      %p187 = scmp.ne.s32.totalorder %s182, %s184
      %p188 = scmp.eq.s32.totalorder %s22, 0
      %p189 = por %p187, %p188
      %p190 = scmp.ne.s32.totalorder %s182, %s184
      %p191 = scmp.eq.s32.totalorder %s27, 1
      %p192 = por %p190, %p191
      %p193 = scmp.ne.s32.totalorder %s184, %s185
      %p194 = scmp.eq.s32.totalorder %s27, 0
      %p195 = por %p193, %p194
      %p196 = scmp.ne.s32.totalorder %s184, %s185
      %p197 = scmp.eq.s32.totalorder %s28, 1
      %p198 = por %p196, %p197
      %p200 = scmp.ne.s32.totalorder %s185, %s199
      %p201 = scmp.eq.s32.totalorder %s28, 0
      %p202 = por %p200, %p201
      %s204 = sadd.s32 %s203, 1
      %p207 = scmp.eq.s32.totalorder %s22, 1
      %p208 = scmp.ne.s32.totalorder %s203, %s205
      %p209 = scmp.eq.s32.totalorder %s22, 0
      %p210 = por %p208, %p209
      %p211 = scmp.ne.s32.totalorder %s203, %s205
      %p212 = scmp.eq.s32.totalorder %s27, 1
      %p213 = por %p211, %p212
      %p214 = scmp.ne.s32.totalorder %s205, %s206
      %p215 = scmp.eq.s32.totalorder %s27, 0
      %p216 = por %p214, %p215
      %p217 = scmp.ne.s32.totalorder %s205, %s206
      %p218 = scmp.eq.s32.totalorder %s28, 1
      %p219 = por %p217, %p218
      %p221 = scmp.ne.s32.totalorder %s206, %s220
      %p222 = scmp.eq.s32.totalorder %s28, 0
      %p223 = por %p221, %p222
      %s225 = sadd.s32 %s224, 1
      %p228 = scmp.eq.s32.totalorder %s22, 1
      %p229 = scmp.ne.s32.totalorder %s224, %s226
      %p230 = scmp.eq.s32.totalorder %s22, 0
      %p231 = por %p229, %p230
      %p232 = scmp.ne.s32.totalorder %s224, %s226
      %p233 = scmp.eq.s32.totalorder %s27, 1
      %p234 = por %p232, %p233
      %p235 = scmp.ne.s32.totalorder %s226, %s227
      %p236 = scmp.eq.s32.totalorder %s27, 0
      %p237 = por %p235, %p236
      %p238 = scmp.ne.s32.totalorder %s226, %s227
      %p239 = scmp.eq.s32.totalorder %s28, 1
      %p240 = por %p238, %p239
      %p242 = scmp.ne.s32.totalorder %s227, %s241
      %p243 = scmp.eq.s32.totalorder %s28, 0
      %p244 = por %p242, %p243
      %s246 = sadd.s32 %s245, 1
      %p249 = scmp.eq.s32.totalorder %s22, 1
      %p250 = scmp.ne.s32.totalorder %s245, %s247
      %p251 = scmp.eq.s32.totalorder %s22, 0
      %p252 = por %p250, %p251
      %p253 = scmp.ne.s32.totalorder %s245, %s247
      %p254 = scmp.eq.s32.totalorder %s27, 1
      %p255 = por %p253, %p254
      %p256 = scmp.ne.s32.totalorder %s247, %s248
      %p257 = scmp.eq.s32.totalorder %s27, 0
      %p258 = por %p256, %p257
      %p259 = scmp.ne.s32.totalorder %s247, %s248
      %p260 = scmp.eq.s32.totalorder %s28, 1
      %p261 = por %p259, %p260
      %p263 = scmp.ne.s32.totalorder %s248, %s262
      %p264 = scmp.eq.s32.totalorder %s28, 0
      %p265 = por %p263, %p264
      %s266 = ssub.s32 %s22, %s29
      %p267 = scmp.eq.s32.totalorder %s266, 0
      %s269 = sadd.s32 %s268, 1
      %s270 = scalar_select %p267, %s268, %s269
      %p273 = pneg %p267
      %p274 = scmp.eq.s32.totalorder %s22, 1
      %p275 = por %p273, %p274
      %p276 = scmp.ne.s32.totalorder %s268, %s271
      %p277 = scmp.eq.s32.totalorder %s22, 0
      %p278 = por %p276, %p277
      %p279 = scmp.ne.s32.totalorder %s268, %s271
      %p280 = scmp.eq.s32.totalorder %s27, 1
      %p281 = por %p279, %p280
      %p282 = scmp.ne.s32.totalorder %s271, %s272
      %p283 = scmp.eq.s32.totalorder %s27, 0
      %p284 = por %p282, %p283
      %p285 = scmp.ne.s32.totalorder %s271, %s272
      %p286 = scmp.eq.s32.totalorder %s28, 1
      %p287 = por %p285, %p286
      %p289 = scmp.ne.s32.totalorder %s272, %s288
      %p290 = scmp.eq.s32.totalorder %s28, 0
      %p291 = por %p289, %p290
      %p292 = scmp.le.s32.totalorder 1, %s22
      %p293 = scmp.lt.s32.totalorder %s22, 3
      %p294 = pnand %p292, %p293
      %p295 = pneg %p294
      // Predicated region
      $region9: #{tpu_custom_call.1} parent=5 // pred_check
        _
      $region10: #{tpu_custom_call.1} parent=5 // pred_check_branch
        %297 = sbr.rel (%p294) target = $region12
      $region11: #{tpu_custom_call.1} parent=5 // pred_region
        %s298 = ssub.s32 %s22, 1
        // Predicated region
        $region13: #{tpu_custom_call.1} parent=11 // pred_check
          %p299 = pneg %p69
        $region14: #{tpu_custom_call.1} parent=11 // pred_check_branch
          %301 = sbr.rel (%p299) target = $region16
        $region15: #{tpu_custom_call.1} parent=11 // pred_region
          _
        $region16: #{tpu_custom_call.1} parent=11 // pred_fallthru
          _
        // Predicated region
        $region17: #{tpu_custom_call.1} parent=11 // pred_check
          %p302 = pneg %p90
        $region18: #{tpu_custom_call.1} parent=11 // pred_check_branch
          %304 = sbr.rel (%p302) target = $region20
        $region19: #{tpu_custom_call.1} parent=11 // pred_region
          _
        $region20: #{tpu_custom_call.1} parent=11 // pred_fallthru
          _
        // Predicated region
        $region21: #{tpu_custom_call.1} parent=11 // pred_check
          %p305 = pneg %p111
        $region22: #{tpu_custom_call.1} parent=11 // pred_check_branch
          %307 = sbr.rel (%p305) target = $region24
        $region23: #{tpu_custom_call.1} parent=11 // pred_region
          %309 = vsyncadd [#allocation3], 0
          %s310 = sshll.u32 %s3, 4
          %s311 = int_to_ptr.hbm [resolvable:$true] %s310
          %s312 = sshll.u32 [#allocation2], 4
          %s313 = int_to_ptr.vmem [resolvable:$true] %s312
          %318 = dma.hbm_to_vmem [thread:$0]  %s311, 2048, %s313, [#allocation3], 64, 64, 4
        $region24: #{tpu_custom_call.1} parent=11 // pred_fallthru
          _
        // Predicated region
        $region25: #{tpu_custom_call.1} parent=11 // pred_check
          %p319 = pneg %p132
        $region26: #{tpu_custom_call.1} parent=11 // pred_check_branch
          %321 = sbr.rel (%p319) target = $region28
        $region27: #{tpu_custom_call.1} parent=11 // pred_region
          _
        $region28: #{tpu_custom_call.1} parent=11 // pred_fallthru
          _
        // Predicated region
        $region29: #{tpu_custom_call.1} parent=11 // pred_check
          %p322 = pneg %p153
        $region30: #{tpu_custom_call.1} parent=11 // pred_check_branch
          %324 = sbr.rel (%p322) target = $region32
        $region31: #{tpu_custom_call.1} parent=11 // pred_region
          _
        $region32: #{tpu_custom_call.1} parent=11 // pred_fallthru
          _
        // Predicated region
        $region33: #{tpu_custom_call.1} parent=11 // pred_check
          %p325 = pneg %p174
        $region34: #{tpu_custom_call.1} parent=11 // pred_check_branch
          %327 = sbr.rel (%p325) target = $region36
        $region35: #{tpu_custom_call.1} parent=11 // pred_region
          _
        $region36: #{tpu_custom_call.1} parent=11 // pred_fallthru
          _
        // Predicated region
        $region37: #{tpu_custom_call.1} parent=11 // pred_check
          %p328 = pneg %p195
        $region38: #{tpu_custom_call.1} parent=11 // pred_check_branch
          %330 = sbr.rel (%p328) target = $region40
        $region39: #{tpu_custom_call.1} parent=11 // pred_region
          %332 = vsyncadd [#allocation6], 0
          %s333 = sshll.u32 %s7, 4
          %s334 = int_to_ptr.hbm [resolvable:$true] %s333
          %s335 = sshll.u32 [#allocation5], 4
          %s336 = int_to_ptr.vmem [resolvable:$true] %s335
          %341 = dma.hbm_to_vmem [thread:$0]  %s334, 1024, %s336, [#allocation6], 64, 64, 4
        $region40: #{tpu_custom_call.1} parent=11 // pred_fallthru
          _
        // Predicated region
        $region41: #{tpu_custom_call.1} parent=11 // pred_check
          %p342 = pneg %p216
        $region42: #{tpu_custom_call.1} parent=11 // pred_check_branch
          %344 = sbr.rel (%p342) target = $region44
        $region43: #{tpu_custom_call.1} parent=11 // pred_region
          _
        $region44: #{tpu_custom_call.1} parent=11 // pred_fallthru
          _
        // Predicated region
        $region45: #{tpu_custom_call.1} parent=11 // pred_check
          %p345 = pneg %p237
        $region46: #{tpu_custom_call.1} parent=11 // pred_check_branch
          %347 = sbr.rel (%p345) target = $region48
        $region47: #{tpu_custom_call.1} parent=11 // pred_region
          _
        $region48: #{tpu_custom_call.1} parent=11 // pred_fallthru
          _
        // Predicated region
        $region49: #{tpu_custom_call.1} parent=11 // pred_check
          %p348 = pneg %p258
        $region50: #{tpu_custom_call.1} parent=11 // pred_check_branch
          %350 = sbr.rel (%p348) target = $region52
        $region51: #{tpu_custom_call.1} parent=11 // pred_region
          _
        $region52: #{tpu_custom_call.1} parent=11 // pred_fallthru
          _
      $region12: #{tpu_custom_call.1} parent=5 // pred_fallthru
        _
      %p351 = scmp.lt.s32.totalorder %s22, 2
      // Predicated region
      $region53: #{tpu_custom_call.1} parent=5 // pred_check
        %p352 = pneg %p351
      $region54: #{tpu_custom_call.1} parent=5 // pred_check_branch
        %354 = sbr.rel (%p352) target = $region56
      $region55: #{tpu_custom_call.1} parent=5 // pred_region
        // Predicated region
        $region57: #{tpu_custom_call.1} parent=55 // pred_check
          %p355 = pneg %p42
        $region58: #{tpu_custom_call.1} parent=55 // pred_check_branch
          %357 = sbr.rel (%p355) target = $region60
        $region59: #{tpu_custom_call.1} parent=55 // pred_region
          %s358 = smul.u32 2, %s22
          %p359 = scmp.lt.s32.totalorder %s358, 3
          %s360 = scalar_select %p359, %s358, 3
          %s361 = smul.addr %s360, 8
          %s362 = scalar_lea.vmem %s0, %s361
          %s363 = smul.u32 2, %s22
        $region60: #{tpu_custom_call.1} parent=55 // pred_fallthru
          _
      $region56: #{tpu_custom_call.1} parent=5 // pred_fallthru
        _
      %p364 = scmp.le.s32.totalorder 1, %s22
      %p365 = scmp.lt.s32.totalorder %s22, 3
      %p366 = pnand %p364, %p365
      %p367 = pneg %p366
      // Predicated region
      $region61: #{tpu_custom_call.1} parent=5 // pred_check
        _
      $region62: #{tpu_custom_call.1} parent=5 // pred_check_branch
        %369 = sbr.rel (%p366) target = $region64
      $region63: #{tpu_custom_call.1} parent=5 // pred_region
        %s370 = ssub.s32 %s22, 1
        // Predicated region
        $region65: #{tpu_custom_call.1} parent=63 // pred_check
          %p371 = pneg %p111
        $region66: #{tpu_custom_call.1} parent=63 // pred_check_branch
          %373 = sbr.rel (%p371) target = $region68
        $region67: #{tpu_custom_call.1} parent=63 // pred_region
          %375 = dma.done [#allocation3], 2048
        $region68: #{tpu_custom_call.1} parent=63 // pred_fallthru
          _
        // Predicated region
        $region69: #{tpu_custom_call.1} parent=63 // pred_check
          %p376 = pneg %p195
        $region70: #{tpu_custom_call.1} parent=63 // pred_check_branch
          %378 = sbr.rel (%p376) target = $region72
        $region71: #{tpu_custom_call.1} parent=63 // pred_region
          %380 = dma.done [#allocation6], 1024
        $region72: #{tpu_custom_call.1} parent=63 // pred_fallthru
          _
        %s381 = smul.u32 2, %s27
        %p382 = scmp.lt.s32.totalorder %s381, 3
        %s383 = scalar_select %p382, %s381, 3
        %s384 = smul.addr %s383, 8
        %s385 = scalar_lea.vmem %s0, %s384
        %p386 = pneg %p48
        %p387 = pneg %p45
        %p388 = pneg %p69
        %p389 = pneg %p66
        %p390 = pneg %p90
        %p391 = pneg %p87
        %p392 = pneg %p111
        %p393 = pneg %p108
        %p394 = pneg %p132
        %p395 = pneg %p129
        %p396 = pneg %p153
        %p397 = pneg %p150
        %p398 = pneg %p174
        %p399 = pneg %p171
        %p400 = pneg %p195
        %p401 = pneg %p192
        %p402 = pneg %p216
        %p403 = pneg %p213
        %p404 = pneg %p237
        %p405 = pneg %p234
        %p406 = pneg %p258
        %p407 = pneg %p255
        %p408 = pneg %p284
        %p409 = pneg %p281
        %s410 = sand.u32 %s271, 1
        %s411 = scalar_lea.sflag [#allocation4], %s410
        %s412 = sand.u32 %s271, 1
        %s413 = smul.addr %s412, 16
        %s414 = scalar_lea.vmem [#allocation7], %s413
        %s415 = smul.u32 2, %s27
        %p416 = scmp.lt.s32.totalorder %s415, 3
        %s417 = scalar_select %p416, %s415, 3
        %s418 = smul.addr %s417, 8
        %s419 = scalar_lea.vmem %s0, %s418
        %s420 = smul.u32 2, %s27
        %s421 = smul.u32 2, %s27
        %v423 = vld [vmem:[%s1] sm:$0xf]
        %v424 = vld [vmem:[%s1 + $0x4] sm:$0xf]
        %v425 = vld [vmem:[%s419] sm:$0xff]
        %v426 = vld [vmem:[%s419 + $0x8] sm:$0xff]
        %v427 = vpack.c.bf16 %v426, %v425
        %v428 = vld [vmem:[%s2] sm:$0x1]
        %v430 = vperm.slane %v428, 0
        %v434 = vunpack.c.l.b16 %v423
        %v435 = vunpack.c.l.b16 %v424
        %v436 = vpack.c.b16 %v435, %v434
        %vm438 = vcmask 130048
        %v440 = vsel %vm438, %v427, 0
        %442 = vmatpush.bf16.msra.mxu0 0
        %443 = vmatpush.bf16.msra.mxu0 0
        %444 = vmatpush.bf16.msra.mxu0 0
        %445 = vmatpush.bf16.msra.mxu0 0
        %446 = vmatpush.bf16.msra.mxu0 0
        %447 = vmatpush.bf16.msra.mxu0 0
        %448 = vmatpush.bf16.msra.mxu0 0
        %449 = vmatpush.bf16.msra.mxu0 %v436
        %450 = vmatmul.bf16.gmra.mxu0 %v440
        %v451 = vpop.f32.mrf.mxu0
        %v452 = vadd.f32 %v430, %v451
        %v453 = vpop.f32.mrf.mxu0
        %v454 = vadd.f32 %v430, %v453
        %455 = vdwg.mxu0
        %v456 = vmul.f32 %v452, 1.442695
        %v457 = vpow.pop %v456
        %v458 = vmul.f32 %v454, 1.442695
        %v459 = vpow.pop %v458
        %v460 = vadd.f32 %v457, 1.0
        %v461 = vadd.f32 %v459, 1.0
        %v462 = vmul.f32 %v460, %v460
        %v463 = vmul.f32 %v461, %v461
        %v464 = vadd.f32 %v462, 1.0
        %v465 = vadd.f32 %v463, 1.0
        %v466 = vrcp.pop %v464
        %v467 = vmul.f32 %v464, %v466
        %v468 = vsub.f32 1.0, %v467
        %v469 = vmul.f32 %v466, %v468
        %v470 = vadd.f32 %v466, %v469
        %vm471 = vweird.f32 %v464
        %vm472 = vweird.f32 %v466
        %vm473 = vmor %vm471, %vm472
        %v474 = vsel %vm473, %v466, %v470
        %v475 = vand.u32 2147483647, %v464
        %vm476 = vcmp.eq.f32.partialorder %v475, 8.507059e+37
        %v477 = vand.u32 %v464, 2147483648
        %v478 = vor.u32 1.1754944e-38, %v477
        %v479 = vsel %vm476, %v478, %v474
        %v480 = vrcp.pop %v465
        %v481 = vmul.f32 %v465, %v480
        %v482 = vsub.f32 1.0, %v481
        %v483 = vmul.f32 %v480, %v482
        %v484 = vadd.f32 %v480, %v483
        %vm485 = vweird.f32 %v465
        %vm486 = vweird.f32 %v480
        %vm487 = vmor %vm485, %vm486
        %v488 = vsel %vm487, %v480, %v484
        %v489 = vand.u32 2147483647, %v465
        %vm490 = vcmp.eq.f32.partialorder %v489, 8.507059e+37
        %v491 = vand.u32 %v465, 2147483648
        %v492 = vor.u32 1.1754944e-38, %v491
        %v493 = vsel %vm490, %v492, %v488
        %v494 = vmul.f32 %v479, 2.0
        %v495 = vmul.f32 %v493, 2.0
        %v496 = vsub.f32 1.0, %v494
        %v497 = vsub.f32 1.0, %v495
        %v498 = vmul.f32 %v452, %v496
        %v499 = vmul.f32 %v454, %v497
        %v500 = vld [vmem:[#allocation2] sm:$0xf]
        %v501 = vld [vmem:[#allocation2 + $0x4] sm:$0xf]
        %v502 = vld [vmem:[#allocation2 + $0x8] sm:$0xf]
        %v503 = vld [vmem:[#allocation2 + $0xc] sm:$0xf]
        %v504 = vld [vmem:[#allocation2 + $0x10] sm:$0xf]
        %v505 = vld [vmem:[#allocation2 + $0x14] sm:$0xf]
        %v506 = vld [vmem:[#allocation2 + $0x18] sm:$0xf]
        %v507 = vld [vmem:[#allocation2 + $0x1c] sm:$0xf]
        %v508 = vld [vmem:[#allocation2 + $0x20] sm:$0xf]
        %v509 = vld [vmem:[#allocation2 + $0x24] sm:$0xf]
        %v510 = vld [vmem:[#allocation2 + $0x28] sm:$0xf]
        %v511 = vld [vmem:[#allocation2 + $0x2c] sm:$0xf]
        %v512 = vld [vmem:[#allocation2 + $0x30] sm:$0xf]
        %v513 = vld [vmem:[#allocation2 + $0x34] sm:$0xf]
        %v514 = vld [vmem:[#allocation2 + $0x38] sm:$0xf]
        %v515 = vld [vmem:[#allocation2 + $0x3c] sm:$0xf]
        %v516 = vpack.c.bf16 %v499, %v498
        %v517 = vld [vmem:[%s4] sm:$0x1]
        %v519 = vperm.slane %v517, 0
        %v537 = vunpack.c.l.b16 %v500
        %v538 = vunpack.c.l.b16 %v501
        %v539 = vunpack.c.l.b16 %v502
        %v540 = vunpack.c.l.b16 %v503
        %v541 = vunpack.c.l.b16 %v504
        %v542 = vunpack.c.l.b16 %v505
        %v543 = vunpack.c.l.b16 %v506
        %v544 = vunpack.c.l.b16 %v507
        %v545 = vunpack.c.l.b16 %v508
        %v546 = vunpack.c.l.b16 %v509
        %v547 = vunpack.c.l.b16 %v510
        %v548 = vunpack.c.l.b16 %v511
        %v549 = vunpack.c.l.b16 %v512
        %v550 = vunpack.c.l.b16 %v513
        %v551 = vunpack.c.l.b16 %v514
        %v552 = vunpack.c.l.b16 %v515
        %v553 = vpack.c.b16 %v538, %v537
        %v554 = vpack.c.b16 %v540, %v539
        %v555 = vpack.c.b16 %v542, %v541
        %v556 = vpack.c.b16 %v544, %v543
        %v557 = vpack.c.b16 %v546, %v545
        %v558 = vpack.c.b16 %v548, %v547
        %v559 = vpack.c.b16 %v550, %v549
        %v560 = vpack.c.b16 %v552, %v551
        %569 = vmatpush.bf16.msra.mxu0 %v560
        %570 = vmatpush.bf16.msra.mxu0 %v559
        %571 = vmatpush.bf16.msra.mxu0 %v558
        %572 = vmatpush.bf16.msra.mxu0 %v557
        %573 = vmatpush.bf16.msra.mxu0 %v556
        %574 = vmatpush.bf16.msra.mxu0 %v555
        %575 = vmatpush.bf16.msra.mxu0 %v554
        %576 = vmatpush.bf16.msra.mxu0 %v553
        %577 = vmatmul.bf16.gmra.mxu0 %v516
        %v578 = vpop.f32.mrf.mxu0
        %v579 = vadd.f32 %v519, %v578
        %v580 = vpop.f32.mrf.mxu0
        %v581 = vadd.f32 %v519, %v580
        %582 = vdwg.mxu0
        %v583 = vld [vmem:[%s5] sm:$0x1]
        %v584 = vld [vmem:[%s6] sm:$0x1]
        %585 = vadd.xlane.f32.xlu0 %v579
        %v586 = vpop.xlane.xlu0 %585
        %587 = vadd.xlane.f32.xlu0 %v581
        %v588 = vpop.xlane.xlu0 %587
        %v589 = vrcp.pop 128.0
        %v590 = vmul.f32 128.0, %v589
        %v591 = vsub.f32 1.0, %v590
        %v592 = vmul.f32 %v589, %v591
        %v593 = vadd.f32 %v589, %v592
        %vm594 = vweird.f32 %v589
        %v595 = vsel %vm594, %v589, %v593
        %v596 = vmul.f32 %v586, %v595
        %v597 = vmul.f32 %v588, %v595
        %v598 = vsub.f32 %v579, %v596
        %v599 = vsub.f32 %v581, %v597
        %v600 = vmul.f32 %v598, %v598
        %v601 = vmul.f32 %v599, %v599
        %602 = vadd.xlane.f32.xlu0 %v600
        %v603 = vpop.xlane.xlu0 %602
        %604 = vadd.xlane.f32.xlu0 %v601
        %v605 = vpop.xlane.xlu0 %604
        %v606 = vmul.f32 %v603, %v595
        %v607 = vmul.f32 %v605, %v595
        %v608 = vadd.f32 %v606, 1e-05
        %v609 = vadd.f32 %v607, 1e-05
        %v610 = vrsqrt.pop %v608
        %v611 = vmul.f32 %v610, %v608
        %v612 = vmul.f32 %v611, %v610
        %v613 = vmul.f32 0.5, %v612
        %v614 = vsub.f32 1.5, %v613
        %v615 = vmul.f32 %v610, %v614
        %vm616 = vweird.f32 %v608
        %vm617 = vweird.f32 %v610
        %vm618 = vmor %vm616, %vm617
        %v619 = vsel %vm618, %v610, %v615
        %v620 = vrsqrt.pop %v609
        %v621 = vmul.f32 %v620, %v609
        %v622 = vmul.f32 %v621, %v620
        %v623 = vmul.f32 0.5, %v622
        %v624 = vsub.f32 1.5, %v623
        %v625 = vmul.f32 %v620, %v624
        %vm626 = vweird.f32 %v609
        %vm627 = vweird.f32 %v620
        %vm628 = vmor %vm626, %vm627
        %v629 = vsel %vm628, %v620, %v625
        %v630 = vmul.f32 %v598, %v619
        %v631 = vmul.f32 %v599, %v629
        %v633 = vperm.slane %v583, 0
        %v635 = vmul.f32 %v630, %v633
        %v636 = vmul.f32 %v631, %v633
        %v638 = vperm.slane %v584, 0
        %v640 = vadd.f32 %v635, %v638
        %v641 = vadd.f32 %v636, %v638
        %v642 = vmul.f32 %v640, 1.442695
        %v643 = vpow.pop %v642
        %v644 = vmul.f32 %v641, 1.442695
        %v645 = vpow.pop %v644
        %v646 = vadd.f32 %v643, 1.0
        %v647 = vadd.f32 %v645, 1.0
        %v648 = vmul.f32 %v646, %v646
        %v649 = vmul.f32 %v647, %v647
        %v650 = vadd.f32 %v648, 1.0
        %v651 = vadd.f32 %v649, 1.0
        %v652 = vrcp.pop %v650
        %v653 = vmul.f32 %v650, %v652
        %v654 = vsub.f32 1.0, %v653
        %v655 = vmul.f32 %v652, %v654
        %v656 = vadd.f32 %v652, %v655
        %vm657 = vweird.f32 %v650
        %vm658 = vweird.f32 %v652
        %vm659 = vmor %vm657, %vm658
        %v660 = vsel %vm659, %v652, %v656
        %v661 = vand.u32 2147483647, %v650
        %vm662 = vcmp.eq.f32.partialorder %v661, 8.507059e+37
        %v663 = vand.u32 %v650, 2147483648
        %v664 = vor.u32 1.1754944e-38, %v663
        %v665 = vsel %vm662, %v664, %v660
        %v666 = vrcp.pop %v651
        %v667 = vmul.f32 %v651, %v666
        %v668 = vsub.f32 1.0, %v667
        %v669 = vmul.f32 %v666, %v668
        %v670 = vadd.f32 %v666, %v669
        %vm671 = vweird.f32 %v651
        %vm672 = vweird.f32 %v666
        %vm673 = vmor %vm671, %vm672
        %v674 = vsel %vm673, %v666, %v670
        %v675 = vand.u32 2147483647, %v651
        %vm676 = vcmp.eq.f32.partialorder %v675, 8.507059e+37
        %v677 = vand.u32 %v651, 2147483648
        %v678 = vor.u32 1.1754944e-38, %v677
        %v679 = vsel %vm676, %v678, %v674
        %v680 = vmul.f32 %v665, 2.0
        %v681 = vmul.f32 %v679, 2.0
        %v682 = vsub.f32 1.0, %v680
        %v683 = vsub.f32 1.0, %v681
        %v684 = vmul.f32 %v640, %v682
        %v685 = vmul.f32 %v641, %v683
        %s686 = scalar_lea.vmem [#allocation2], 64
        %v687 = vld [vmem:[%s686] sm:$0xf]
        %v688 = vld [vmem:[%s686 + $0x4] sm:$0xf]
        %v689 = vld [vmem:[%s686 + $0x8] sm:$0xf]
        %v690 = vld [vmem:[%s686 + $0xc] sm:$0xf]
        %v691 = vld [vmem:[%s686 + $0x10] sm:$0xf]
        %v692 = vld [vmem:[%s686 + $0x14] sm:$0xf]
        %v693 = vld [vmem:[%s686 + $0x18] sm:$0xf]
        %v694 = vld [vmem:[%s686 + $0x1c] sm:$0xf]
        %v695 = vld [vmem:[%s686 + $0x20] sm:$0xf]
        %v696 = vld [vmem:[%s686 + $0x24] sm:$0xf]
        %v697 = vld [vmem:[%s686 + $0x28] sm:$0xf]
        %v698 = vld [vmem:[%s686 + $0x2c] sm:$0xf]
        %v699 = vld [vmem:[%s686 + $0x30] sm:$0xf]
        %v700 = vld [vmem:[%s686 + $0x34] sm:$0xf]
        %v701 = vld [vmem:[%s686 + $0x38] sm:$0xf]
        %v702 = vld [vmem:[%s686 + $0x3c] sm:$0xf]
        %v703 = vpack.c.bf16 %v685, %v684
        %s704 = scalar_lea.vmem %s4, 1
        %v705 = vld [vmem:[%s704] sm:$0x1]
        %v707 = vperm.slane %v705, 0
        %v725 = vunpack.c.l.b16 %v687
        %v726 = vunpack.c.l.b16 %v688
        %v727 = vunpack.c.l.b16 %v689
        %v728 = vunpack.c.l.b16 %v690
        %v729 = vunpack.c.l.b16 %v691
        %v730 = vunpack.c.l.b16 %v692
        %v731 = vunpack.c.l.b16 %v693
        %v732 = vunpack.c.l.b16 %v694
        %v733 = vunpack.c.l.b16 %v695
        %v734 = vunpack.c.l.b16 %v696
        %v735 = vunpack.c.l.b16 %v697
        %v736 = vunpack.c.l.b16 %v698
        %v737 = vunpack.c.l.b16 %v699
        %v738 = vunpack.c.l.b16 %v700
        %v739 = vunpack.c.l.b16 %v701
        %v740 = vunpack.c.l.b16 %v702
        %v741 = vpack.c.b16 %v726, %v725
        %v742 = vpack.c.b16 %v728, %v727
        %v743 = vpack.c.b16 %v730, %v729
        %v744 = vpack.c.b16 %v732, %v731
        %v745 = vpack.c.b16 %v734, %v733
        %v746 = vpack.c.b16 %v736, %v735
        %v747 = vpack.c.b16 %v738, %v737
        %v748 = vpack.c.b16 %v740, %v739
        %757 = vmatpush.bf16.msra.mxu0 %v748
        %758 = vmatpush.bf16.msra.mxu0 %v747
        %759 = vmatpush.bf16.msra.mxu0 %v746
        %760 = vmatpush.bf16.msra.mxu0 %v745
        %761 = vmatpush.bf16.msra.mxu0 %v744
        %762 = vmatpush.bf16.msra.mxu0 %v743
        %763 = vmatpush.bf16.msra.mxu0 %v742
        %764 = vmatpush.bf16.msra.mxu0 %v741
        %765 = vmatmul.bf16.gmra.mxu0 %v703
        %v766 = vpop.f32.mrf.mxu0
        %v767 = vadd.f32 %v707, %v766
        %v768 = vpop.f32.mrf.mxu0
        %v769 = vadd.f32 %v707, %v768
        %770 = vdwg.mxu0
        %s771 = scalar_lea.vmem %s5, 1
        %v772 = vld [vmem:[%s771] sm:$0x1]
        %s773 = scalar_lea.vmem %s6, 1
        %v774 = vld [vmem:[%s773] sm:$0x1]
        %775 = vadd.xlane.f32.xlu0 %v767
        %v776 = vpop.xlane.xlu0 %775
        %777 = vadd.xlane.f32.xlu0 %v769
        %v778 = vpop.xlane.xlu0 %777
        %v779 = vmul.f32 %v776, %v595
        %v780 = vmul.f32 %v778, %v595
        %v781 = vsub.f32 %v767, %v779
        %v782 = vsub.f32 %v769, %v780
        %v783 = vmul.f32 %v781, %v781
        %v784 = vmul.f32 %v782, %v782
        %785 = vadd.xlane.f32.xlu0 %v783
        %v786 = vpop.xlane.xlu0 %785
        %787 = vadd.xlane.f32.xlu0 %v784
        %v788 = vpop.xlane.xlu0 %787
        %v789 = vmul.f32 %v786, %v595
        %v790 = vmul.f32 %v788, %v595
        %v791 = vadd.f32 %v789, 1e-05
        %v792 = vadd.f32 %v790, 1e-05
        %v793 = vrsqrt.pop %v791
        %v794 = vmul.f32 %v793, %v791
        %v795 = vmul.f32 %v794, %v793
        %v796 = vmul.f32 0.5, %v795
        %v797 = vsub.f32 1.5, %v796
        %v798 = vmul.f32 %v793, %v797
        %vm799 = vweird.f32 %v791
        %vm800 = vweird.f32 %v793
        %vm801 = vmor %vm799, %vm800
        %v802 = vsel %vm801, %v793, %v798
        %v803 = vrsqrt.pop %v792
        %v804 = vmul.f32 %v803, %v792
        %v805 = vmul.f32 %v804, %v803
        %v806 = vmul.f32 0.5, %v805
        %v807 = vsub.f32 1.5, %v806
        %v808 = vmul.f32 %v803, %v807
        %vm809 = vweird.f32 %v792
        %vm810 = vweird.f32 %v803
        %vm811 = vmor %vm809, %vm810
        %v812 = vsel %vm811, %v803, %v808
        %v813 = vmul.f32 %v781, %v802
        %v814 = vmul.f32 %v782, %v812
        %v816 = vperm.slane %v772, 0
        %v818 = vmul.f32 %v813, %v816
        %v819 = vmul.f32 %v814, %v816
        %v821 = vperm.slane %v774, 0
        %v823 = vadd.f32 %v818, %v821
        %v824 = vadd.f32 %v819, %v821
        %v825 = vmul.f32 %v823, 1.442695
        %v826 = vpow.pop %v825
        %v827 = vmul.f32 %v824, 1.442695
        %v828 = vpow.pop %v827
        %v829 = vadd.f32 %v826, 1.0
        %v830 = vadd.f32 %v828, 1.0
        %v831 = vmul.f32 %v829, %v829
        %v832 = vmul.f32 %v830, %v830
        %v833 = vadd.f32 %v831, 1.0
        %v834 = vadd.f32 %v832, 1.0
        %v835 = vrcp.pop %v833
        %v836 = vmul.f32 %v833, %v835
        %v837 = vsub.f32 1.0, %v836
        %v838 = vmul.f32 %v835, %v837
        %v839 = vadd.f32 %v835, %v838
        %vm840 = vweird.f32 %v833
        %vm841 = vweird.f32 %v835
        %vm842 = vmor %vm840, %vm841
        %v843 = vsel %vm842, %v835, %v839
        %v844 = vand.u32 2147483647, %v833
        %vm845 = vcmp.eq.f32.partialorder %v844, 8.507059e+37
        %v846 = vand.u32 %v833, 2147483648
        %v847 = vor.u32 1.1754944e-38, %v846
        %v848 = vsel %vm845, %v847, %v843
        %v849 = vrcp.pop %v834
        %v850 = vmul.f32 %v834, %v849
        %v851 = vsub.f32 1.0, %v850
        %v852 = vmul.f32 %v849, %v851
        %v853 = vadd.f32 %v849, %v852
        %vm854 = vweird.f32 %v834
        %vm855 = vweird.f32 %v849
        %vm856 = vmor %vm854, %vm855
        %v857 = vsel %vm856, %v849, %v853
        %v858 = vand.u32 2147483647, %v834
        %vm859 = vcmp.eq.f32.partialorder %v858, 8.507059e+37
        %v860 = vand.u32 %v834, 2147483648
        %v861 = vor.u32 1.1754944e-38, %v860
        %v862 = vsel %vm859, %v861, %v857
        %v863 = vmul.f32 %v848, 2.0
        %v864 = vmul.f32 %v862, 2.0
        %v865 = vsub.f32 1.0, %v863
        %v866 = vsub.f32 1.0, %v864
        %v867 = vmul.f32 %v823, %v865
        %v868 = vmul.f32 %v824, %v866
        %v869 = vld [vmem:[#allocation5] sm:$0xf]
        %v870 = vld [vmem:[#allocation5 + $0x4] sm:$0xf]
        %v871 = vld [vmem:[#allocation5 + $0x8] sm:$0xf]
        %v872 = vld [vmem:[#allocation5 + $0xc] sm:$0xf]
        %v873 = vld [vmem:[#allocation5 + $0x10] sm:$0xf]
        %v874 = vld [vmem:[#allocation5 + $0x14] sm:$0xf]
        %v875 = vld [vmem:[#allocation5 + $0x18] sm:$0xf]
        %v876 = vld [vmem:[#allocation5 + $0x1c] sm:$0xf]
        %v877 = vld [vmem:[#allocation5 + $0x20] sm:$0xf]
        %v878 = vld [vmem:[#allocation5 + $0x24] sm:$0xf]
        %v879 = vld [vmem:[#allocation5 + $0x28] sm:$0xf]
        %v880 = vld [vmem:[#allocation5 + $0x2c] sm:$0xf]
        %v881 = vld [vmem:[#allocation5 + $0x30] sm:$0xf]
        %v882 = vld [vmem:[#allocation5 + $0x34] sm:$0xf]
        %v883 = vld [vmem:[#allocation5 + $0x38] sm:$0xf]
        %v884 = vld [vmem:[#allocation5 + $0x3c] sm:$0xf]
        %v885 = vpack.c.bf16 %v868, %v867
        %v886 = vld [vmem:[%s8] sm:$0x1]
        %v888 = vperm.slane %v886, 0
        %v906 = vunpack.c.l.b16 %v869
        %v907 = vunpack.c.l.b16 %v870
        %v908 = vunpack.c.l.b16 %v871
        %v909 = vunpack.c.l.b16 %v872
        %v910 = vunpack.c.l.b16 %v873
        %v911 = vunpack.c.l.b16 %v874
        %v912 = vunpack.c.l.b16 %v875
        %v913 = vunpack.c.l.b16 %v876
        %v914 = vunpack.c.l.b16 %v877
        %v915 = vunpack.c.l.b16 %v878
        %v916 = vunpack.c.l.b16 %v879
        %v917 = vunpack.c.l.b16 %v880
        %v918 = vunpack.c.l.b16 %v881
        %v919 = vunpack.c.l.b16 %v882
        %v920 = vunpack.c.l.b16 %v883
        %v921 = vunpack.c.l.b16 %v884
        %v922 = vpack.c.b16 %v907, %v906
        %v923 = vpack.c.b16 %v909, %v908
        %v924 = vpack.c.b16 %v911, %v910
        %v925 = vpack.c.b16 %v913, %v912
        %v926 = vpack.c.b16 %v915, %v914
        %v927 = vpack.c.b16 %v917, %v916
        %v928 = vpack.c.b16 %v919, %v918
        %v929 = vpack.c.b16 %v921, %v920
        %938 = vmatpush.bf16.msra.mxu0 %v929
        %939 = vmatpush.bf16.msra.mxu0 %v928
        %940 = vmatpush.bf16.msra.mxu0 %v927
        %941 = vmatpush.bf16.msra.mxu0 %v926
        %942 = vmatpush.bf16.msra.mxu0 %v925
        %943 = vmatpush.bf16.msra.mxu0 %v924
        %944 = vmatpush.bf16.msra.mxu0 %v923
        %945 = vmatpush.bf16.msra.mxu0 %v922
        %946 = vmatmul.bf16.gmra.mxu0 %v885
        %v947 = vpop.f32.mrf.mxu0
        %v948 = vadd.f32 %v888, %v947
        %v949 = vpop.f32.mrf.mxu0
        %v950 = vadd.f32 %v888, %v949
        %951 = vdwg.mxu0
        %v952 = vld [vmem:[%s9] sm:$0x1]
        %v954 = vperm.slane %v952, 0
        %v956 = vmax.f32 %v948, %v954
        %v957 = vmax.f32 %v950, %v954
        %v958 = vld [vmem:[%s10] sm:$0x1]
        %v960 = vperm.slane %v958, 0
        %v962 = vmin.f32 %v956, %v960
        %v963 = vmin.f32 %v957, %v960
        %964 = vst [vmem:[%s414] sm:$0xff] %v962
        %965 = vst [vmem:[%s414 + $0x8] sm:$0xff] %v963
        %s966 = sand.u32 %s271, 1
        %s967 = scalar_lea.sflag [#allocation4], %s966
        %s968 = sand.u32 %s271, 1
        %s969 = smul.addr %s968, 16
        %s970 = scalar_lea.vmem [#allocation7], %s969
        // Predicated region
        $region73: #{tpu_custom_call.1} parent=63 // pred_check
          %p971 = pneg %p281
        $region74: #{tpu_custom_call.1} parent=63 // pred_check_branch
          %973 = sbr.rel (%p971) target = $region76
        $region75: #{tpu_custom_call.1} parent=63 // pred_region
          %s974 = smul.u32 2, %s27
          %976 = vsyncadd %s967, 0
          %s977 = smul.addr %s974, 8
          %s978 = scalar_lea.hbm %s11, %s977
          %s979 = sshll.u32 %s970, 4
          %s980 = int_to_ptr.vmem [resolvable:$true] %s979
          %s981 = sshll.u32 %s978, 4
          %s982 = int_to_ptr.hbm [resolvable:$true] %s981
          %987 = dma.vmem_to_hbm [thread:$0]  %s980, 256, %s982, %s967, 128, 128, 8
        $region76: #{tpu_custom_call.1} parent=63 // pred_fallthru
          _
      $region64: #{tpu_custom_call.1} parent=5 // pred_fallthru
        _
      %p988 = scmp.le.s32.totalorder 2, %s22
      // Predicated region
      $region77: #{tpu_custom_call.1} parent=5 // pred_check
        %p989 = pneg %p988
      $region78: #{tpu_custom_call.1} parent=5 // pred_check_branch
        %991 = sbr.rel (%p989) target = $region80
      $region79: #{tpu_custom_call.1} parent=5 // pred_region
        %s992 = ssub.s32 %s22, 2
        // Predicated region
        $region81: #{tpu_custom_call.1} parent=79 // pred_check
          %p993 = pneg %p287
        $region82: #{tpu_custom_call.1} parent=79 // pred_check_branch
          %995 = sbr.rel (%p993) target = $region84
        $region83: #{tpu_custom_call.1} parent=79 // pred_region
          %s996 = sand.u32 %s272, 1
          %s997 = scalar_lea.sflag [#allocation4], %s996
          %s998 = sand.u32 %s272, 1
          %s999 = smul.addr %s998, 16
          %s1000 = scalar_lea.vmem [#allocation7], %s999
          %1002 = dma.done %s997, 256
        $region84: #{tpu_custom_call.1} parent=79 // pred_fallthru
          _
      $region80: #{tpu_custom_call.1} parent=5 // pred_fallthru
        _
    $region6: #{tpu_custom_call.1} parent=1 // loop_footer
      %s26 = sadd.s32 1, %s22
    $region7: #{tpu_custom_call.1} parent=1 // loop_footer_branch
      %21 = sbr.rel target = $region3
    $region8: #{tpu_custom_call.1} parent=1 // loop_exit
      _
    %1003 = vsyncpa [#allocation3], 1
    %s1004 = scalar_lea.sflag [#allocation3], 1
    %1005 = vsyncpa %s1004, 1
    %1006 = vsyncpa [#allocation6], 1
    %1007 = vsyncpa [#allocation4], 1
    %s1008 = scalar_lea.sflag [#allocation4], 1
    %1009 = vsyncpa %s1008, 1

</llo_original>
